<compile_context>
chip_gen: v6e
topology: v6e:2x2x1
jax: 0.10.0
libtpu: 0.0.40
codegen_flags: <defaults>
</compile_context>

<pallas_src>
import functools

import jax
import jax.numpy as jnp
from jax.experimental import pallas as pl
from jax.experimental.pallas import tpu as pltpu


def _mha_kernel(q_ref, k_ref, v_ref,
                wq_ref, bq_ref, wk_ref, bk_ref, wv_ref, bv_ref,
                wo_ref, bo_ref,
                o_ref,
                qh_scr, m_scr, l_scr, acc_scr,
                *, num_heads, att_size):
    nh, dk = num_heads, att_size
    ki = pl.program_id(2)
    n_kv = pl.num_programs(2)
    # MXU compute dtype follows the weights (bf16 weights -> bf16 MXU path on
    # v6e/v7x); accumulation and softmax stay float32.
    cdt = wq_ref.dtype

    def to_heads(x2d):
        # (t, H) -> (nh, t, dk): minor-dim split reshape + one layout-aware
        # permute (single relayout instead of nh lane slices / K transposes).
        t = x2d.shape[0]
        return pltpu.einshape("qhd->hqd", x2d.reshape(t, nh, dk))

    @pl.when(ki == 0)
    def _init():
        # Q projection once per (batch, q-block).  1/sqrt(dk) is already folded
        # into wq/bq by the wrapper, so no per-element scale multiply here.
        x = q_ref[...].astype(cdt)                                    # (tq, H)
        qp = jnp.dot(x, wq_ref[...], preferred_element_type=jnp.float32)
        qh_scr[...] = to_heads(qp + bq_ref[...])                      # (nh, tq, dk)
        m_scr[...] = jnp.full(m_scr.shape, -jnp.inf, jnp.float32)
        l_scr[...] = jnp.zeros(l_scr.shape, jnp.float32)
        acc_scr[...] = jnp.zeros(acc_scr.shape, jnp.float32)

    # K / V projections for the current KV block (full-width MXU matmuls).
    xk = k_ref[...].astype(cdt)                                       # (tkv, H)
    xv = v_ref[...].astype(cdt)
    kh = to_heads(jnp.dot(xk, wk_ref[...],
                          preferred_element_type=jnp.float32) + bk_ref[...])
    vh = to_heads(jnp.dot(xv, wv_ref[...],
                          preferred_element_type=jnp.float32) + bv_ref[...])

    # Scores (nh, tq, tkv): batched matmul over the head axis, contracting dk —
    # K is consumed untransposed (no explicit Kh.T).
    s = jnp.einsum('hqd,hkd->hqk',
                   qh_scr[...].astype(cdt), kh.astype(cdt),
                   preferred_element_type=jnp.float32)
    # TODO(synk): attn_bias addition and mask.masked_fill(mask, 0) are not
    #             plumbed through (the PyTorch forward defaults are None);
    #             att_dropout is identity (eval mode).

    # Online softmax, float32 elementwise path.
    m_prev = m_scr[...]
    m_new = jnp.maximum(m_prev, jnp.max(s, axis=-1, keepdims=True))
    alpha = jnp.exp(m_prev - m_new)
    p = jnp.exp(s - m_new)
    l_scr[...] = alpha * l_scr[...] + jnp.sum(p, axis=-1, keepdims=True)
    acc_scr[...] = alpha * acc_scr[...] + jnp.einsum(
        'hqk,hkd->hqd', p.astype(cdt), vh.astype(cdt),
        preferred_element_type=jnp.float32)
    m_scr[...] = m_new

    @pl.when(ki == n_kv - 1)
    def _finalize():
        # Normalize with an EUP reciprocal (frees VALU slots), rearrange back to
        # (tq, H) with one relayout, and do a single full-width output matmul
        # (no per-head concat).
        ctx = acc_scr[...] * pl.reciprocal(l_scr[...], approx=True)   # (nh, tq, dk)
        tq = ctx.shape[1]
        ctx2 = pltpu.einshape("hqd->qhd", ctx).reshape(tq, nh * dk)   # (tq, H)
        out = jnp.dot(ctx2.astype(cdt), wo_ref[...],
                      preferred_element_type=jnp.float32) + bo_ref[...]
        o_ref[...] = out.astype(o_ref.dtype)


def fold_scale(params, num_heads):
    """One-time constant transform: fold 1/sqrt(dk) into the Q projection."""
    H = params["wq_t"].shape[0]
    scale = (H // num_heads) ** (-0.5)
    out = dict(params)
    out["wq_t"] = params["wq_t"] * scale
    out["bq"] = params["bq"] * scale
    return out


def multi_head_attention(q, k, v, params, *, num_heads,
                         q_block=128, kv_block=128):
    """q, k, v: [B, S, H].  params: scale-folded (see fold_scale).  -> [B, S, H]."""
    B, S, H = q.shape
    att_size = H // num_heads
    assert num_heads * att_size == H

    tq = min(q_block, S)
    tkv = min(kv_block, S)
    assert S % tq == 0 and S % tkv == 0, "sequence must tile evenly"
    n_q, n_kv = S // tq, S // tkv

    kernel = functools.partial(_mha_kernel, num_heads=num_heads,
                               att_size=att_size)

    def full(shape):
        return pl.BlockSpec(shape, lambda b, qi, ki: (0,) * len(shape))

    q_spec = pl.BlockSpec((pl.Squeezed(), tq, H), lambda b, qi, ki: (b, qi, 0))
    kv_spec = pl.BlockSpec((pl.Squeezed(), tkv, H), lambda b, qi, ki: (b, ki, 0))
    o_spec = pl.BlockSpec((pl.Squeezed(), tq, H), lambda b, qi, ki: (b, qi, 0))

    # Advisory cost estimate so XLA schedules the custom call sensibly.
    act_bytes = q.dtype.itemsize
    w_bytes = params["wq_t"].dtype.itemsize
    flops = 8 * B * S * H * H + 4 * B * S * S * H
    transcendentals = B * num_heads * S * S
    bytes_accessed = act_bytes * 4 * B * S * H + w_bytes * 4 * (H * H + H)

    return pl.pallas_call(
        kernel,
        out_shape=jax.ShapeDtypeStruct((B, S, H), q.dtype),
        grid_spec=pltpu.PrefetchScalarGridSpec(
            num_scalar_prefetch=0,
            grid=(B, n_q, n_kv),
            in_specs=[
                q_spec, kv_spec, kv_spec,                 # q, k, v activations
                full((H, H)), full((1, H)),               # Wq^T (scaled), bq (scaled)
                full((H, H)), full((1, H)),               # Wk^T, bk
                full((H, H)), full((1, H)),               # Wv^T, bv
                full((H, H)), full((1, H)),               # Wo^T, bo
            ],
            out_specs=o_spec,
            scratch_shapes=[
                pltpu.VMEM((num_heads, tq, att_size), jnp.float32),  # Q heads
                pltpu.VMEM((num_heads, tq, 1), jnp.float32),         # running max
                pltpu.VMEM((num_heads, tq, 1), jnp.float32),         # running sum
                pltpu.VMEM((num_heads, tq, att_size), jnp.float32),  # out accumulator
            ]),
        compiler_params=pltpu.CompilerParams(
            dimension_semantics=("parallel", "parallel", "arbitrary"),
            vmem_limit_bytes=32 * 1024 * 1024),
        cost_estimate=pl.CostEstimate(
            flops=flops, transcendentals=transcendentals,
            bytes_accessed=bytes_accessed),
    )(q, k, v,
      params["wq_t"], params["bq"], params["wk_t"], params["bk"],
      params["wv_t"], params["bv"], params["wo_t"], params["bo"])


def _reference(q, k, v, raw_params, num_heads):
    """Plain-JAX reference matching the PyTorch forward (no bias/mask, eval)."""
    B, S, H = q.shape
    dk = H // num_heads
    scale = dk ** (-0.5)

    def lin(x, w_t, b):
        return x @ w_t + b[0]

    Q = lin(q, raw_params["wq_t"], raw_params["bq"]).reshape(B, S, num_heads, dk)
    K = lin(k, raw_params["wk_t"], raw_params["bk"]).reshape(B, S, num_heads, dk)
    V = lin(v, raw_params["wv_t"], raw_params["bv"]).reshape(B, S, num_heads, dk)
    Q = jnp.transpose(Q, (0, 2, 1, 3)) * scale
    K = jnp.transpose(K, (0, 2, 1, 3))
    V = jnp.transpose(V, (0, 2, 1, 3))
    scores = jnp.einsum("bhqd,bhkd->bhqk", Q, K)
    p = jax.nn.softmax(scores, axis=-1)
    ctx = jnp.einsum("bhqk,bhkd->bhqd", p, V)
    ctx = jnp.transpose(ctx, (0, 2, 1, 3)).reshape(B, S, H)
    return lin(ctx, raw_params["wo_t"], raw_params["bo"])


if __name__ == "__main__":
    # Small shapes consistent with the module: hidden=32, heads=4, seq=8, batch=2.
    B, S, H, NUM_HEADS = 2, 8, 32, 4

    key = jax.random.PRNGKey(0)
    keys = jax.random.split(key, 12)

    def init_linear(kw, kb, fan_in, fan_out):
        # nn.Linear-style uniform init, deterministic.
        lim = 1.0 / (fan_in ** 0.5)
        w = jax.random.uniform(kw, (fan_out, fan_in), jnp.float32, -lim, lim)
        b = jax.random.uniform(kb, (fan_out,), jnp.float32, -lim, lim)
        return w.T, b.reshape(1, fan_out)   # pre-transposed weight, 2-D bias

    wq_t, bq = init_linear(keys[0], keys[1], H, H)
    wk_t, bk = init_linear(keys[2], keys[3], H, H)
    wv_t, bv = init_linear(keys[4], keys[5], H, H)
    wo_t, bo = init_linear(keys[6], keys[7], H, H)
    raw_params = dict(wq_t=wq_t, bq=bq, wk_t=wk_t, bk=bk,
                      wv_t=wv_t, bv=bv, wo_t=wo_t, bo=bo)
    # For the v6e/v7x bf16 MXU path, cast raw_params (and q/k/v) to bfloat16.
    params = fold_scale(raw_params, NUM_HEADS)

    q = jax.random.normal(keys[8], (B, S, H), jnp.float32)
    k = jax.random.normal(keys[9], (B, S, H), jnp.float32)
    v = jax.random.normal(keys[10], (B, S, H), jnp.float32)

    out = multi_head_attention(q, k, v, params, num_heads=NUM_HEADS)
    out = jax.block_until_ready(out)

    ref = _reference(q, k, v, raw_params, NUM_HEADS)
    assert out.shape == (B, S, H)
    # Loose tolerance: kernel uses the EUP approx reciprocal for the softmax
    # denominator; everything else accumulates in f32.
    assert jnp.allclose(out, ref, atol=2e-2, rtol=2e-2), "mismatch vs reference"

    print("KERNEL_OK")
</pallas_src>

<mosaic_0001>
module attributes {stable_mosaic.version = 11 : i64} {
  func.func @_mha_kernel(%arg0: i32, %arg1: i32, %arg2: i32, %arg3: memref<1x8x32xf32, #tpu.memory_space<vmem>>, %arg4: memref<1x8x32xf32, #tpu.memory_space<vmem>>, %arg5: memref<1x8x32xf32, #tpu.memory_space<vmem>>, %arg6: memref<32x32xf32, #tpu.memory_space<vmem>>, %arg7: memref<1x32xf32, #tpu.memory_space<vmem>>, %arg8: memref<32x32xf32, #tpu.memory_space<vmem>>, %arg9: memref<1x32xf32, #tpu.memory_space<vmem>>, %arg10: memref<32x32xf32, #tpu.memory_space<vmem>>, %arg11: memref<1x32xf32, #tpu.memory_space<vmem>>, %arg12: memref<32x32xf32, #tpu.memory_space<vmem>>, %arg13: memref<1x32xf32, #tpu.memory_space<vmem>>, %arg14: memref<1x8x32xf32, #tpu.memory_space<vmem>>, %arg15: memref<4x8x8xf32, #tpu.memory_space<vmem>>, %arg16: memref<4x8x1xf32, #tpu.memory_space<vmem>>, %arg17: memref<4x8x1xf32, #tpu.memory_space<vmem>>, %arg18: memref<4x8x8xf32, #tpu.memory_space<vmem>>) attributes {dimension_semantics = [#tpu.dimension_semantics<parallel>, #tpu.dimension_semantics<parallel>, #tpu.dimension_semantics<arbitrary>], iteration_bounds = array<i64: 2, 1, 1>, scalar_prefetch = 0 : i64, scratch_operands = 4 : i64, tpu.core_type = #tpu.core_type<tc>, window_params = [{transform_indices = @transform_0, window_bounds = array<i64: 1, 8, 32>}, {transform_indices = @transform_1, window_bounds = array<i64: 1, 8, 32>}, {transform_indices = @transform_2, window_bounds = array<i64: 1, 8, 32>}, {pipeline_mode = #tpu.pipeline_mode<synchronous>, transform_indices = @transform_3, window_bounds = array<i64: 32, 32>}, {pipeline_mode = #tpu.pipeline_mode<synchronous>, transform_indices = @transform_4, window_bounds = array<i64: 1, 32>}, {pipeline_mode = #tpu.pipeline_mode<synchronous>, transform_indices = @transform_5, window_bounds = array<i64: 32, 32>}, {pipeline_mode = #tpu.pipeline_mode<synchronous>, transform_indices = @transform_6, window_bounds = array<i64: 1, 32>}, {pipeline_mode = #tpu.pipeline_mode<synchronous>, transform_indices = @transform_7, window_bounds = array<i64: 32, 32>}, {pipeline_mode = #tpu.pipeline_mode<synchronous>, transform_indices = @transform_8, window_bounds = array<i64: 1, 32>}, {pipeline_mode = #tpu.pipeline_mode<synchronous>, transform_indices = @transform_9, window_bounds = array<i64: 32, 32>}, {pipeline_mode = #tpu.pipeline_mode<synchronous>, transform_indices = @transform_10, window_bounds = array<i64: 1, 32>}, {transform_indices = @transform_11, window_bounds = array<i64: 1, 8, 32>}]} {
    %c0_i32 = arith.constant 0 : i32
    %0 = arith.cmpi eq, %arg2, %c0_i32 : i32
    %1 = arith.extui %0 : i1 to i32
    %c0_i32_0 = arith.constant 0 : i32
    %2 = arith.cmpi ne, %1, %c0_i32_0 : i32
    scf.if %2 {
      %c0_42 = arith.constant 0 : index
      %c0_43 = arith.constant 0 : index
      %c0_44 = arith.constant 0 : index
      %48 = vector.load %arg3[%c0_42, %c0_43, %c0_44] : memref<1x8x32xf32, #tpu.memory_space<vmem>>, vector<1x8x32xf32>
      %49 = vector.shape_cast %48 : vector<1x8x32xf32> to vector<8x32xf32>
      %c0_45 = arith.constant 0 : index
      %c0_46 = arith.constant 0 : index
      %50 = vector.load %arg6[%c0_45, %c0_46] : memref<32x32xf32, #tpu.memory_space<vmem>>, vector<32x32xf32>
      %cst_47 = arith.constant dense<0.000000e+00> : vector<8x32xf32>
      %51 = tpu.matmul %49, %50, %cst_47 {dimension_numbers = #tpu.dot_dimension_numbers<[1], [0], [0], [1], [0, 0, 1, 1], [], []>} : vector<8x32xf32>, vector<32x32xf32>, vector<8x32xf32> -> vector<8x32xf32>
      %c0_48 = arith.constant 0 : index
      %c0_49 = arith.constant 0 : index
      %52 = vector.load %arg7[%c0_48, %c0_49] : memref<1x32xf32, #tpu.memory_space<vmem>>, vector<1x32xf32>
      %53 = vector.broadcast %52 : vector<1x32xf32> to vector<8x32xf32>
      %54 = arith.addf %51, %53 : vector<8x32xf32>
      %55 = vector.shape_cast %54 : vector<8x32xf32> to vector<8x4x8xf32>
      %56 = tpu.transpose %55, [1, 0, 2] : vector<8x4x8xf32> -> vector<4x8x8xf32>
      %c0_50 = arith.constant 0 : index
      %c0_51 = arith.constant 0 : index
      %c0_52 = arith.constant 0 : index
      %57 = vector.load %arg15[%c0_50, %c0_51, %c0_52] : memref<4x8x8xf32, #tpu.memory_space<vmem>>, vector<4x8x8xf32>
      tpu.vector_store %arg15[%c0_50, %c0_51, %c0_52], %56 {strides = array<i32>} : memref<4x8x8xf32, #tpu.memory_space<vmem>>, vector<4x8x8xf32>,
      %cst_53 = arith.constant 0xFF800000 : f32
      %58 = vector.broadcast %cst_53 : f32 to vector<4x8x1xf32>
      %c0_54 = arith.constant 0 : index
      %c0_55 = arith.constant 0 : index
      %c0_56 = arith.constant 0 : index
      %59 = vector.load %arg16[%c0_54, %c0_55, %c0_56] : memref<4x8x1xf32, #tpu.memory_space<vmem>>, vector<4x8x1xf32>
      tpu.vector_store %arg16[%c0_54, %c0_55, %c0_56], %58 {strides = array<i32>} : memref<4x8x1xf32, #tpu.memory_space<vmem>>, vector<4x8x1xf32>,
      %cst_57 = arith.constant 0.000000e+00 : f32
      %60 = vector.broadcast %cst_57 : f32 to vector<4x8x1xf32>
      %c0_58 = arith.constant 0 : index
      %c0_59 = arith.constant 0 : index
      %c0_60 = arith.constant 0 : index
      %61 = vector.load %arg17[%c0_58, %c0_59, %c0_60] : memref<4x8x1xf32, #tpu.memory_space<vmem>>, vector<4x8x1xf32>
      tpu.vector_store %arg17[%c0_58, %c0_59, %c0_60], %60 {strides = array<i32>} : memref<4x8x1xf32, #tpu.memory_space<vmem>>, vector<4x8x1xf32>,
      %cst_61 = arith.constant 0.000000e+00 : f32
      %62 = vector.broadcast %cst_61 : f32 to vector<4x8x8xf32>
      %c0_62 = arith.constant 0 : index
      %c0_63 = arith.constant 0 : index
      %c0_64 = arith.constant 0 : index
      %63 = vector.load %arg18[%c0_62, %c0_63, %c0_64] : memref<4x8x8xf32, #tpu.memory_space<vmem>>, vector<4x8x8xf32>
      tpu.vector_store %arg18[%c0_62, %c0_63, %c0_64], %62 {strides = array<i32>} : memref<4x8x8xf32, #tpu.memory_space<vmem>>, vector<4x8x8xf32>,
    } else {
    }
    %c0 = arith.constant 0 : index
    %c0_1 = arith.constant 0 : index
    %c0_2 = arith.constant 0 : index
    %3 = vector.load %arg4[%c0, %c0_1, %c0_2] : memref<1x8x32xf32, #tpu.memory_space<vmem>>, vector<1x8x32xf32>
    %4 = vector.shape_cast %3 : vector<1x8x32xf32> to vector<8x32xf32>
    %c0_3 = arith.constant 0 : index
    %c0_4 = arith.constant 0 : index
    %c0_5 = arith.constant 0 : index
    %5 = vector.load %arg5[%c0_3, %c0_4, %c0_5] : memref<1x8x32xf32, #tpu.memory_space<vmem>>, vector<1x8x32xf32>
    %6 = vector.shape_cast %5 : vector<1x8x32xf32> to vector<8x32xf32>
    %c0_6 = arith.constant 0 : index
    %c0_7 = arith.constant 0 : index
    %7 = vector.load %arg8[%c0_6, %c0_7] : memref<32x32xf32, #tpu.memory_space<vmem>>, vector<32x32xf32>
    %cst = arith.constant dense<0.000000e+00> : vector<8x32xf32>
    %8 = tpu.matmul %4, %7, %cst {dimension_numbers = #tpu.dot_dimension_numbers<[1], [0], [0], [1], [0, 0, 1, 1], [], []>} : vector<8x32xf32>, vector<32x32xf32>, vector<8x32xf32> -> vector<8x32xf32>
    %c0_8 = arith.constant 0 : index
    %c0_9 = arith.constant 0 : index
    %9 = vector.load %arg9[%c0_8, %c0_9] : memref<1x32xf32, #tpu.memory_space<vmem>>, vector<1x32xf32>
    %10 = vector.broadcast %9 : vector<1x32xf32> to vector<8x32xf32>
    %11 = arith.addf %8, %10 : vector<8x32xf32>
    %12 = vector.shape_cast %11 : vector<8x32xf32> to vector<8x4x8xf32>
    %13 = tpu.transpose %12, [1, 0, 2] : vector<8x4x8xf32> -> vector<4x8x8xf32>
    %c0_10 = arith.constant 0 : index
    %c0_11 = arith.constant 0 : index
    %14 = vector.load %arg10[%c0_10, %c0_11] : memref<32x32xf32, #tpu.memory_space<vmem>>, vector<32x32xf32>
    %cst_12 = arith.constant dense<0.000000e+00> : vector<8x32xf32>
    %15 = tpu.matmul %6, %14, %cst_12 {dimension_numbers = #tpu.dot_dimension_numbers<[1], [0], [0], [1], [0, 0, 1, 1], [], []>} : vector<8x32xf32>, vector<32x32xf32>, vector<8x32xf32> -> vector<8x32xf32>
    %c0_13 = arith.constant 0 : index
    %c0_14 = arith.constant 0 : index
    %16 = vector.load %arg11[%c0_13, %c0_14] : memref<1x32xf32, #tpu.memory_space<vmem>>, vector<1x32xf32>
    %17 = vector.broadcast %16 : vector<1x32xf32> to vector<8x32xf32>
    %18 = arith.addf %15, %17 : vector<8x32xf32>
    %19 = vector.shape_cast %18 : vector<8x32xf32> to vector<8x4x8xf32>
    %20 = tpu.transpose %19, [1, 0, 2] : vector<8x4x8xf32> -> vector<4x8x8xf32>
    %c0_15 = arith.constant 0 : index
    %c0_16 = arith.constant 0 : index
    %c0_17 = arith.constant 0 : index
    %21 = vector.load %arg15[%c0_15, %c0_16, %c0_17] : memref<4x8x8xf32, #tpu.memory_space<vmem>>, vector<4x8x8xf32>
    "tpu.trace_start"() <{level = 10 : i32, message = "hqd,hkd->hqk"}> : () -> ()
    %cst_18 = arith.constant dense<0.000000e+00> : vector<4x8x8xf32>
    %22 = tpu.matmul %21, %13, %cst_18 {dimension_numbers = #tpu.dot_dimension_numbers<[2], [2], [1], [1], [0, 0, 0, 1, 1, 1], [0], [0]>} : vector<4x8x8xf32>, vector<4x8x8xf32>, vector<4x8x8xf32> -> vector<4x8x8xf32>
    "tpu.trace_stop"() : () -> ()
    %c0_19 = arith.constant 0 : index
    %c0_20 = arith.constant 0 : index
    %c0_21 = arith.constant 0 : index
    %23 = vector.load %arg16[%c0_19, %c0_20, %c0_21] : memref<4x8x1xf32, #tpu.memory_space<vmem>>, vector<4x8x1xf32>
    %cst_22 = arith.constant dense<0xFF800000> : vector<4x8xf32>
    %24 = vector.multi_reduction <maximumf>, %22, %cst_22 [2] : vector<4x8x8xf32> to vector<4x8xf32>
    %25 = vector.shape_cast %24 : vector<4x8xf32> to vector<4x8x1xf32>
    %26 = arith.maximumf %23, %25 : vector<4x8x1xf32>
    %27 = arith.subf %23, %26 : vector<4x8x1xf32>
    %28 = math.exp %27 : vector<4x8x1xf32>
    %29 = vector.broadcast %26 : vector<4x8x1xf32> to vector<4x8x8xf32>
    %30 = arith.subf %22, %29 : vector<4x8x8xf32>
    %31 = math.exp %30 : vector<4x8x8xf32>
    %c0_23 = arith.constant 0 : index
    %c0_24 = arith.constant 0 : index
    %c0_25 = arith.constant 0 : index
    %32 = vector.load %arg17[%c0_23, %c0_24, %c0_25] : memref<4x8x1xf32, #tpu.memory_space<vmem>>, vector<4x8x1xf32>
    %33 = arith.mulf %28, %32 : vector<4x8x1xf32>
    %cst_26 = arith.constant dense<0.000000e+00> : vector<4x8xf32>
    %34 = vector.multi_reduction <add>, %31, %cst_26 [2] : vector<4x8x8xf32> to vector<4x8xf32>
    %35 = vector.shape_cast %34 : vector<4x8xf32> to vector<4x8x1xf32>
    %36 = arith.addf %33, %35 : vector<4x8x1xf32>
    %c0_27 = arith.constant 0 : index
    %c0_28 = arith.constant 0 : index
    %c0_29 = arith.constant 0 : index
    %37 = vector.load %arg17[%c0_27, %c0_28, %c0_29] : memref<4x8x1xf32, #tpu.memory_space<vmem>>, vector<4x8x1xf32>
    tpu.vector_store %arg17[%c0_27, %c0_28, %c0_29], %36 {strides = array<i32>} : memref<4x8x1xf32, #tpu.memory_space<vmem>>, vector<4x8x1xf32>,
    %c0_30 = arith.constant 0 : index
    %c0_31 = arith.constant 0 : index
    %c0_32 = arith.constant 0 : index
    %38 = vector.load %arg18[%c0_30, %c0_31, %c0_32] : memref<4x8x8xf32, #tpu.memory_space<vmem>>, vector<4x8x8xf32>
    %39 = vector.broadcast %28 : vector<4x8x1xf32> to vector<4x8x8xf32>
    %40 = arith.mulf %39, %38 : vector<4x8x8xf32>
    "tpu.trace_start"() <{level = 10 : i32, message = "hqk,hkd->hqd"}> : () -> ()
    %cst_33 = arith.constant dense<0.000000e+00> : vector<4x8x8xf32>
    %41 = tpu.matmul %31, %20, %cst_33 {dimension_numbers = #tpu.dot_dimension_numbers<[2], [1], [1], [2], [0, 0, 0, 1, 1, 2], [0], [0]>} : vector<4x8x8xf32>, vector<4x8x8xf32>, vector<4x8x8xf32> -> vector<4x8x8xf32>
    "tpu.trace_stop"() : () -> ()
    %42 = arith.addf %40, %41 : vector<4x8x8xf32>
    %c0_34 = arith.constant 0 : index
    %c0_35 = arith.constant 0 : index
    %c0_36 = arith.constant 0 : index
    %43 = vector.load %arg18[%c0_34, %c0_35, %c0_36] : memref<4x8x8xf32, #tpu.memory_space<vmem>>, vector<4x8x8xf32>
    tpu.vector_store %arg18[%c0_34, %c0_35, %c0_36], %42 {strides = array<i32>} : memref<4x8x8xf32, #tpu.memory_space<vmem>>, vector<4x8x8xf32>,
    %c0_37 = arith.constant 0 : index
    %c0_38 = arith.constant 0 : index
    %c0_39 = arith.constant 0 : index
    %44 = vector.load %arg16[%c0_37, %c0_38, %c0_39] : memref<4x8x1xf32, #tpu.memory_space<vmem>>, vector<4x8x1xf32>
    tpu.vector_store %arg16[%c0_37, %c0_38, %c0_39], %26 {strides = array<i32>} : memref<4x8x1xf32, #tpu.memory_space<vmem>>, vector<4x8x1xf32>,
    %c0_i32_40 = arith.constant 0 : i32
    %45 = arith.cmpi eq, %arg2, %c0_i32_40 : i32
    %46 = arith.extui %45 : i1 to i32
    %c0_i32_41 = arith.constant 0 : i32
    %47 = arith.cmpi ne, %46, %c0_i32_41 : i32
    scf.if %47 {
      %c0_42 = arith.constant 0 : index
      %c0_43 = arith.constant 0 : index
      %c0_44 = arith.constant 0 : index
      %48 = vector.load %arg18[%c0_42, %c0_43, %c0_44] : memref<4x8x8xf32, #tpu.memory_space<vmem>>, vector<4x8x8xf32>
      %c0_45 = arith.constant 0 : index
      %c0_46 = arith.constant 0 : index
      %c0_47 = arith.constant 0 : index
      %49 = vector.load %arg17[%c0_45, %c0_46, %c0_47] : memref<4x8x1xf32, #tpu.memory_space<vmem>>, vector<4x8x1xf32>
      %50 = tpu.reciprocal %49 {approx = true} : vector<4x8x1xf32> -> vector<4x8x1xf32>
      %51 = vector.broadcast %50 : vector<4x8x1xf32> to vector<4x8x8xf32>
      %52 = arith.mulf %48, %51 : vector<4x8x8xf32>
      %53 = tpu.transpose %52, [1, 0, 2] : vector<4x8x8xf32> -> vector<8x4x8xf32>
      %54 = vector.shape_cast %53 : vector<8x4x8xf32> to vector<8x32xf32>
      %c0_48 = arith.constant 0 : index
      %c0_49 = arith.constant 0 : index
      %55 = vector.load %arg12[%c0_48, %c0_49] : memref<32x32xf32, #tpu.memory_space<vmem>>, vector<32x32xf32>
      %cst_50 = arith.constant dense<0.000000e+00> : vector<8x32xf32>
      %56 = tpu.matmul %54, %55, %cst_50 {dimension_numbers = #tpu.dot_dimension_numbers<[1], [0], [0], [1], [0, 0, 1, 1], [], []>} : vector<8x32xf32>, vector<32x32xf32>, vector<8x32xf32> -> vector<8x32xf32>
      %c0_51 = arith.constant 0 : index
      %c0_52 = arith.constant 0 : index
      %57 = vector.load %arg13[%c0_51, %c0_52] : memref<1x32xf32, #tpu.memory_space<vmem>>, vector<1x32xf32>
      %58 = vector.broadcast %57 : vector<1x32xf32> to vector<8x32xf32>
      %59 = arith.addf %56, %58 : vector<8x32xf32>
      %c0_53 = arith.constant 0 : index
      %c0_54 = arith.constant 0 : index
      %c0_55 = arith.constant 0 : index
      %60 = vector.load %arg14[%c0_53, %c0_54, %c0_55] : memref<1x8x32xf32, #tpu.memory_space<vmem>>, vector<1x8x32xf32>
      %61 = vector.shape_cast %60 : vector<1x8x32xf32> to vector<8x32xf32>
      %62 = vector.shape_cast %59 : vector<8x32xf32> to vector<1x8x32xf32>
      tpu.vector_store %arg14[%c0_53, %c0_54, %c0_55], %62 {strides = array<i32>} : memref<1x8x32xf32, #tpu.memory_space<vmem>>, vector<1x8x32xf32>,
    } else {
    }
    return
  }
  func.func @transform_0(%arg0: i32, %arg1: i32, %arg2: i32) -> (i32, i32, i32) {
    %c0_i32 = arith.constant 0 : i32
    %c0_i32_0 = arith.constant 0 : i32
    return %arg0, %arg1, %c0_i32 : i32, i32, i32
  }
  func.func @transform_1(%arg0: i32, %arg1: i32, %arg2: i32) -> (i32, i32, i32) {
    %c0_i32 = arith.constant 0 : i32
    %c0_i32_0 = arith.constant 0 : i32
    return %arg0, %arg2, %c0_i32 : i32, i32, i32
  }
  func.func @transform_2(%arg0: i32, %arg1: i32, %arg2: i32) -> (i32, i32, i32) {
    %c0_i32 = arith.constant 0 : i32
    %c0_i32_0 = arith.constant 0 : i32
    return %arg0, %arg2, %c0_i32 : i32, i32, i32
  }
  func.func @transform_3(%arg0: i32, %arg1: i32, %arg2: i32) -> (i32, i32) {
    %c0_i32 = arith.constant 0 : i32
    %c0_i32_0 = arith.constant 0 : i32
    %c0_i32_1 = arith.constant 0 : i32
    return %c0_i32, %c0_i32_0 : i32, i32
  }
  func.func @transform_4(%arg0: i32, %arg1: i32, %arg2: i32) -> (i32, i32) {
    %c0_i32 = arith.constant 0 : i32
    %c0_i32_0 = arith.constant 0 : i32
    %c0_i32_1 = arith.constant 0 : i32
    return %c0_i32, %c0_i32_0 : i32, i32
  }
  func.func @transform_5(%arg0: i32, %arg1: i32, %arg2: i32) -> (i32, i32) {
    %c0_i32 = arith.constant 0 : i32
    %c0_i32_0 = arith.constant 0 : i32
    %c0_i32_1 = arith.constant 0 : i32
    return %c0_i32, %c0_i32_0 : i32, i32
  }
  func.func @transform_6(%arg0: i32, %arg1: i32, %arg2: i32) -> (i32, i32) {
    %c0_i32 = arith.constant 0 : i32
    %c0_i32_0 = arith.constant 0 : i32
    %c0_i32_1 = arith.constant 0 : i32
    return %c0_i32, %c0_i32_0 : i32, i32
  }
  func.func @transform_7(%arg0: i32, %arg1: i32, %arg2: i32) -> (i32, i32) {
    %c0_i32 = arith.constant 0 : i32
    %c0_i32_0 = arith.constant 0 : i32
    %c0_i32_1 = arith.constant 0 : i32
    return %c0_i32, %c0_i32_0 : i32, i32
  }
  func.func @transform_8(%arg0: i32, %arg1: i32, %arg2: i32) -> (i32, i32) {
    %c0_i32 = arith.constant 0 : i32
    %c0_i32_0 = arith.constant 0 : i32
    %c0_i32_1 = arith.constant 0 : i32
    return %c0_i32, %c0_i32_0 : i32, i32
  }
  func.func @transform_9(%arg0: i32, %arg1: i32, %arg2: i32) -> (i32, i32) {
    %c0_i32 = arith.constant 0 : i32
    %c0_i32_0 = arith.constant 0 : i32
    %c0_i32_1 = arith.constant 0 : i32
    return %c0_i32, %c0_i32_0 : i32, i32
  }
  func.func @transform_10(%arg0: i32, %arg1: i32, %arg2: i32) -> (i32, i32) {
    %c0_i32 = arith.constant 0 : i32
    %c0_i32_0 = arith.constant 0 : i32
    %c0_i32_1 = arith.constant 0 : i32
    return %c0_i32, %c0_i32_0 : i32, i32
  }
  func.func @transform_11(%arg0: i32, %arg1: i32, %arg2: i32) -> (i32, i32, i32) {
    %c0_i32 = arith.constant 0 : i32
    %c0_i32_0 = arith.constant 0 : i32
    return %arg0, %arg1, %c0_i32 : i32, i32, i32
  }
}

</mosaic_0001>

<llo_original>
// kernel: tpu_custom_call.1
$region0: #{tpu_custom_call.1}
  #allocation0 [shape = 'u32[]', space=smem, size = 0x4, offset = 0x4, fixed_abs, tag = 'smem constant byte address 0x4 - core index']
  #allocation1 [shape = 'u32[144,128]{1,0:T(1,128)}', space=vmem, size = 0x12000, scoped, tag = 'internal scratch']
  #allocation2 [shape = 'f32[4,8,8]{2,1,0:T(8,128)}', space=vmem, size = 0x4000, scoped, tag = 'scratch operand']
  #allocation3 [shape = 'f32[4,8,1]{2,1,0:T(8,128)}', space=vmem, size = 0x4000, scoped, tag = 'scratch operand']
  #allocation4 [shape = 'f32[4,8,1]{2,1,0:T(8,128)}', space=vmem, size = 0x4000, scoped, tag = 'scratch operand']
  #allocation5 [shape = 'f32[4,8,8]{2,1,0:T(8,128)}', space=vmem, size = 0x4000, scoped, tag = 'scratch operand']
  %s0 = inlined_call_operand.hbm [shape: f32[2,8,32], index: 0, kind: input, shape index: {}]
  %s1 = inlined_call_operand.hbm [shape: f32[2,8,32], index: 1, kind: input, shape index: {}]
  %s2 = inlined_call_operand.hbm [shape: f32[2,8,32], index: 2, kind: input, shape index: {}]
  %s3 = inlined_call_operand.hbm [shape: f32[32,32], index: 3, kind: input, shape index: {}]
  %s4 = inlined_call_operand.vmem [shape: f32[1,32], index: 4, kind: input, shape index: {}]
  %s5 = inlined_call_operand.hbm [shape: f32[32,32], index: 5, kind: input, shape index: {}]
  %s6 = inlined_call_operand.vmem [shape: f32[1,32], index: 6, kind: input, shape index: {}]
  %s7 = inlined_call_operand.hbm [shape: f32[32,32], index: 7, kind: input, shape index: {}]
  %s8 = inlined_call_operand.vmem [shape: f32[1,32], index: 8, kind: input, shape index: {}]
  %s9 = inlined_call_operand.hbm [shape: f32[32,32], index: 9, kind: input, shape index: {}]
  %s10 = inlined_call_operand.vmem [shape: f32[1,32], index: 10, kind: input, shape index: {}]
  %s11 = inlined_call_operand.hbm [shape: f32[2,8,32], index: 11, kind: output, shape index: {}]
  %s12 = sld [smem:[#allocation0]]
  $region113: #{tpu_custom_call.1} parent=0
    _
  %s14 = ssub.s32 1, %s12
  %s15 = scalar_select 0, %s14, %s12
  $region1: #{tpu_custom_call.1} parent=0
    #allocation6 [shape = 'u8[8192]{0}', space=vmem, size = 0x2000, scoped, tag = 'input window, operand 0']
    #allocation7 [shape = 's32[2]{0}', space=sflag, size = 0x8, scoped, tag = 'scoped memory for tpu_custom_call.1']
    #allocation8 [shape = 's32[2]{0}', space=sflag, size = 0x8, scoped, tag = 'scoped memory for tpu_custom_call.1']
    #allocation9 [shape = 'u8[8192]{0}', space=vmem, size = 0x2000, scoped, tag = 'input window, operand 1']
    #allocation10 [shape = 's32[2]{0}', space=sflag, size = 0x8, scoped, tag = 'scoped memory for tpu_custom_call.1']
    #allocation11 [shape = 'u8[8192]{0}', space=vmem, size = 0x2000, scoped, tag = 'input window, operand 2']
    #allocation12 [shape = 'u8[16384]{0}', space=vmem, size = 0x4000, scoped, tag = 'input window, operand 3, single buffered']
    #allocation13 [shape = 's32[1]{0}', space=sflag, size = 0x4, scoped, tag = 'scoped memory for tpu_custom_call.1']
    #allocation14 [shape = 'u8[16384]{0}', space=vmem, size = 0x4000, scoped, tag = 'input window, operand 5, single buffered']
    #allocation15 [shape = 'u8[16384]{0}', space=vmem, size = 0x4000, scoped, tag = 'input window, operand 7, single buffered']
    #allocation16 [shape = 's32[1]{0}', space=sflag, size = 0x4, scoped, tag = 'scoped memory for tpu_custom_call.1']
    #allocation17 [shape = 'u8[16384]{0}', space=vmem, size = 0x4000, scoped, tag = 'input window, operand 9, single buffered']
    #allocation18 [shape = 'u8[8192]{0}', space=vmem, size = 0x2000, scoped, tag = 'output window, operand 0']
    %16 = vsyncpa [#allocation7], 0
    %s17 = scalar_lea.sflag [#allocation7], 1
    %18 = vsyncpa %s17, 0
    %19 = vsyncpa [#allocation10], 0
    %s20 = scalar_lea.sflag [#allocation10], 1
    %21 = vsyncpa %s20, 0
    %22 = vsyncpa [#allocation13], 0
    %23 = vsyncpa [#allocation16], 0
    %24 = vsyncpa [#allocation8], 0
    %s25 = scalar_lea.sflag [#allocation8], 1
    %26 = vsyncpa %s25, 0
    loop: start=0, step=1, limit=4
    $region2: #{tpu_custom_call.1} parent=1 // loop_pre_header
      _
    $region3: #{tpu_custom_call.1} parent=1 // loop_header
      %s28 = sphi 0, %s32
      %p29 = scmp.ge.s32.totalorder %s28, 4
      %s35 = sphi 0, %s54
      %s36 = sphi 0, %s50
      %s37 = sphi 0, %s46
      %s38 = sphi 0, %s35
      %s39 = sphi 0, %s36
      %s40 = sphi 0, %s37
      %s41 = sphi 0, %s38
      %s42 = sphi 0, %s39
      %s43 = sphi 0, %s40
      %s59 = sphi 0, %s61
      %s62 = sphi 0, %s59
      %s63 = sphi 0, %s62
      %s79 = sphi 0, %s63
      %s87 = sphi 0, %s89
      %s90 = sphi 0, %s87
      %s91 = sphi 0, %s90
      %s107 = sphi 0, %s91
      %s115 = sphi 0, %s117
      %s118 = sphi 0, %s115
      %s119 = sphi 0, %s118
      %s135 = sphi 0, %s119
      %s139 = sphi 0, %s139
      %s141 = sphi 0, %s139
      %s142 = sphi 0, %s141
      %s156 = sphi 0, %s142
      %s160 = sphi 0, %s160
      %s162 = sphi 0, %s160
      %s163 = sphi 0, %s162
      %s177 = sphi 0, %s163
      %s181 = sphi 0, %s181
      %s183 = sphi 0, %s181
      %s184 = sphi 0, %s183
      %s198 = sphi 0, %s184
      %s202 = sphi 0, %s202
      %s204 = sphi 0, %s202
      %s205 = sphi 0, %s204
      %s219 = sphi 0, %s205
      %s223 = sphi 0, %s223
      %s225 = sphi 0, %s223
      %s226 = sphi 0, %s225
      %s240 = sphi 0, %s226
      %s244 = sphi 0, %s244
      %s246 = sphi 0, %s244
      %s247 = sphi 0, %s246
      %s261 = sphi 0, %s247
      %s265 = sphi 0, %s265
      %s267 = sphi 0, %s265
      %s268 = sphi 0, %s267
      %s282 = sphi 0, %s268
      %s286 = sphi 0, %s286
      %s288 = sphi 0, %s286
      %s289 = sphi 0, %s288
      %s303 = sphi 0, %s289
      %s311 = sphi 0, %s313
      %s314 = sphi 0, %s311
      %s315 = sphi 0, %s314
      %s331 = sphi 0, %s315
    $region4: #{tpu_custom_call.1} parent=1 // loop_header_branch
      %31 = sbr.rel (%p29) target = $region8
    $region5: #{tpu_custom_call.1} parent=1 // loop_body
      %s33 = ssub.s32 %s28, 1
      %s34 = ssub.s32 %s28, 2
      %s44 = sadd.s32 1, %s37
      %p45 = scmp.ge.s32.totalorder %s44, 1
      %s46 = scalar_select %p45, 0, %s44
      %s47 = sadd.s32 1, %s36
      %s48 = scalar_select %p45, %s47, %s36
      %p49 = scmp.ge.s32.totalorder %s48, 1
      %s50 = scalar_select %p49, 0, %s48
      %s51 = sadd.s32 1, %s35
      %s52 = scalar_select %p49, %s51, %s35
      %p53 = scmp.ge.s32.totalorder %s52, 2
      %s54 = scalar_select %p53, 0, %s52
      %s55 = ssub.s32 %s35, %s54
      %s56 = ssub.s32 %s36, %s50
      %s57 = sor.u32 %s55, %s56
      %p58 = scmp.eq.s32.totalorder %s57, 0
      %s60 = sadd.s32 %s59, 1
      %s61 = scalar_select %p58, %s59, %s60
      %p64 = pneg %p58
      %p65 = scmp.eq.s32.totalorder %s28, 1
      %p66 = por %p64, %p65
      %p67 = scmp.ne.s32.totalorder %s59, %s62
      %p68 = scmp.eq.s32.totalorder %s28, 0
      %p69 = por %p67, %p68
      %p70 = scmp.ne.s32.totalorder %s59, %s62
      %p71 = scmp.eq.s32.totalorder %s33, 1
      %p72 = por %p70, %p71
      %p73 = scmp.ne.s32.totalorder %s62, %s63
      %p74 = scmp.eq.s32.totalorder %s33, 0
      %p75 = por %p73, %p74
      %p76 = scmp.ne.s32.totalorder %s62, %s63
      %p77 = scmp.eq.s32.totalorder %s34, 1
      %p78 = por %p76, %p77
      %p80 = scmp.ne.s32.totalorder %s63, %s79
      %p81 = scmp.eq.s32.totalorder %s34, 0
      %p82 = por %p80, %p81
      %s83 = ssub.s32 %s35, %s54
      %s84 = ssub.s32 %s37, %s46
      %s85 = sor.u32 %s83, %s84
      %p86 = scmp.eq.s32.totalorder %s85, 0
      %s88 = sadd.s32 %s87, 1
      %s89 = scalar_select %p86, %s87, %s88
      %p92 = pneg %p86
      %p93 = scmp.eq.s32.totalorder %s28, 1
      %p94 = por %p92, %p93
      %p95 = scmp.ne.s32.totalorder %s87, %s90
      %p96 = scmp.eq.s32.totalorder %s28, 0
      %p97 = por %p95, %p96
      %p98 = scmp.ne.s32.totalorder %s87, %s90
      %p99 = scmp.eq.s32.totalorder %s33, 1
      %p100 = por %p98, %p99
      %p101 = scmp.ne.s32.totalorder %s90, %s91
      %p102 = scmp.eq.s32.totalorder %s33, 0
      %p103 = por %p101, %p102
      %p104 = scmp.ne.s32.totalorder %s90, %s91
      %p105 = scmp.eq.s32.totalorder %s34, 1
      %p106 = por %p104, %p105
      %p108 = scmp.ne.s32.totalorder %s91, %s107
      %p109 = scmp.eq.s32.totalorder %s34, 0
      %p110 = por %p108, %p109
      %s111 = ssub.s32 %s35, %s54
      %s112 = ssub.s32 %s37, %s46
      %s113 = sor.u32 %s111, %s112
      %p114 = scmp.eq.s32.totalorder %s113, 0
      %s116 = sadd.s32 %s115, 1
      %s117 = scalar_select %p114, %s115, %s116
      %p120 = pneg %p114
      %p121 = scmp.eq.s32.totalorder %s28, 1
      %p122 = por %p120, %p121
      %p123 = scmp.ne.s32.totalorder %s115, %s118
      %p124 = scmp.eq.s32.totalorder %s28, 0
      %p125 = por %p123, %p124
      %p126 = scmp.ne.s32.totalorder %s115, %s118
      %p127 = scmp.eq.s32.totalorder %s33, 1
      %p128 = por %p126, %p127
      %p129 = scmp.ne.s32.totalorder %s118, %s119
      %p130 = scmp.eq.s32.totalorder %s33, 0
      %p131 = por %p129, %p130
      %p132 = scmp.ne.s32.totalorder %s118, %s119
      %p133 = scmp.eq.s32.totalorder %s34, 1
      %p134 = por %p132, %p133
      %p136 = scmp.ne.s32.totalorder %s119, %s135
      %p137 = scmp.eq.s32.totalorder %s34, 0
      %p138 = por %p136, %p137
      %s140 = sadd.s32 %s139, 1
      %p143 = scmp.eq.s32.totalorder %s28, 1
      %p144 = scmp.ne.s32.totalorder %s139, %s141
      %p145 = scmp.eq.s32.totalorder %s28, 0
      %p146 = por %p144, %p145
      %p147 = scmp.ne.s32.totalorder %s139, %s141
      %p148 = scmp.eq.s32.totalorder %s33, 1
      %p149 = por %p147, %p148
      %p150 = scmp.ne.s32.totalorder %s141, %s142
      %p151 = scmp.eq.s32.totalorder %s33, 0
      %p152 = por %p150, %p151
      %p153 = scmp.ne.s32.totalorder %s141, %s142
      %p154 = scmp.eq.s32.totalorder %s34, 1
      %p155 = por %p153, %p154
      %p157 = scmp.ne.s32.totalorder %s142, %s156
      %p158 = scmp.eq.s32.totalorder %s34, 0
      %p159 = por %p157, %p158
      %s161 = sadd.s32 %s160, 1
      %p164 = scmp.eq.s32.totalorder %s28, 1
      %p165 = scmp.ne.s32.totalorder %s160, %s162
      %p166 = scmp.eq.s32.totalorder %s28, 0
      %p167 = por %p165, %p166
      %p168 = scmp.ne.s32.totalorder %s160, %s162
      %p169 = scmp.eq.s32.totalorder %s33, 1
      %p170 = por %p168, %p169
      %p171 = scmp.ne.s32.totalorder %s162, %s163
      %p172 = scmp.eq.s32.totalorder %s33, 0
      %p173 = por %p171, %p172
      %p174 = scmp.ne.s32.totalorder %s162, %s163
      %p175 = scmp.eq.s32.totalorder %s34, 1
      %p176 = por %p174, %p175
      %p178 = scmp.ne.s32.totalorder %s163, %s177
      %p179 = scmp.eq.s32.totalorder %s34, 0
      %p180 = por %p178, %p179
      %s182 = sadd.s32 %s181, 1
      %p185 = scmp.eq.s32.totalorder %s28, 1
      %p186 = scmp.ne.s32.totalorder %s181, %s183
      %p187 = scmp.eq.s32.totalorder %s28, 0
      %p188 = por %p186, %p187
      %p189 = scmp.ne.s32.totalorder %s181, %s183
      %p190 = scmp.eq.s32.totalorder %s33, 1
      %p191 = por %p189, %p190
      %p192 = scmp.ne.s32.totalorder %s183, %s184
      %p193 = scmp.eq.s32.totalorder %s33, 0
      %p194 = por %p192, %p193
      %p195 = scmp.ne.s32.totalorder %s183, %s184
      %p196 = scmp.eq.s32.totalorder %s34, 1
      %p197 = por %p195, %p196
      %p199 = scmp.ne.s32.totalorder %s184, %s198
      %p200 = scmp.eq.s32.totalorder %s34, 0
      %p201 = por %p199, %p200
      %s203 = sadd.s32 %s202, 1
      %p206 = scmp.eq.s32.totalorder %s28, 1
      %p207 = scmp.ne.s32.totalorder %s202, %s204
      %p208 = scmp.eq.s32.totalorder %s28, 0
      %p209 = por %p207, %p208
      %p210 = scmp.ne.s32.totalorder %s202, %s204
      %p211 = scmp.eq.s32.totalorder %s33, 1
      %p212 = por %p210, %p211
      %p213 = scmp.ne.s32.totalorder %s204, %s205
      %p214 = scmp.eq.s32.totalorder %s33, 0
      %p215 = por %p213, %p214
      %p216 = scmp.ne.s32.totalorder %s204, %s205
      %p217 = scmp.eq.s32.totalorder %s34, 1
      %p218 = por %p216, %p217
      %p220 = scmp.ne.s32.totalorder %s205, %s219
      %p221 = scmp.eq.s32.totalorder %s34, 0
      %p222 = por %p220, %p221
      %s224 = sadd.s32 %s223, 1
      %p227 = scmp.eq.s32.totalorder %s28, 1
      %p228 = scmp.ne.s32.totalorder %s223, %s225
      %p229 = scmp.eq.s32.totalorder %s28, 0
      %p230 = por %p228, %p229
      %p231 = scmp.ne.s32.totalorder %s223, %s225
      %p232 = scmp.eq.s32.totalorder %s33, 1
      %p233 = por %p231, %p232
      %p234 = scmp.ne.s32.totalorder %s225, %s226
      %p235 = scmp.eq.s32.totalorder %s33, 0
      %p236 = por %p234, %p235
      %p237 = scmp.ne.s32.totalorder %s225, %s226
      %p238 = scmp.eq.s32.totalorder %s34, 1
      %p239 = por %p237, %p238
      %p241 = scmp.ne.s32.totalorder %s226, %s240
      %p242 = scmp.eq.s32.totalorder %s34, 0
      %p243 = por %p241, %p242
      %s245 = sadd.s32 %s244, 1
      %p248 = scmp.eq.s32.totalorder %s28, 1
      %p249 = scmp.ne.s32.totalorder %s244, %s246
      %p250 = scmp.eq.s32.totalorder %s28, 0
      %p251 = por %p249, %p250
      %p252 = scmp.ne.s32.totalorder %s244, %s246
      %p253 = scmp.eq.s32.totalorder %s33, 1
      %p254 = por %p252, %p253
      %p255 = scmp.ne.s32.totalorder %s246, %s247
      %p256 = scmp.eq.s32.totalorder %s33, 0
      %p257 = por %p255, %p256
      %p258 = scmp.ne.s32.totalorder %s246, %s247
      %p259 = scmp.eq.s32.totalorder %s34, 1
      %p260 = por %p258, %p259
      %p262 = scmp.ne.s32.totalorder %s247, %s261
      %p263 = scmp.eq.s32.totalorder %s34, 0
      %p264 = por %p262, %p263
      %s266 = sadd.s32 %s265, 1
      %p269 = scmp.eq.s32.totalorder %s28, 1
      %p270 = scmp.ne.s32.totalorder %s265, %s267
      %p271 = scmp.eq.s32.totalorder %s28, 0
      %p272 = por %p270, %p271
      %p273 = scmp.ne.s32.totalorder %s265, %s267
      %p274 = scmp.eq.s32.totalorder %s33, 1
      %p275 = por %p273, %p274
      %p276 = scmp.ne.s32.totalorder %s267, %s268
      %p277 = scmp.eq.s32.totalorder %s33, 0
      %p278 = por %p276, %p277
      %p279 = scmp.ne.s32.totalorder %s267, %s268
      %p280 = scmp.eq.s32.totalorder %s34, 1
      %p281 = por %p279, %p280
      %p283 = scmp.ne.s32.totalorder %s268, %s282
      %p284 = scmp.eq.s32.totalorder %s34, 0
      %p285 = por %p283, %p284
      %s287 = sadd.s32 %s286, 1
      %p290 = scmp.eq.s32.totalorder %s28, 1
      %p291 = scmp.ne.s32.totalorder %s286, %s288
      %p292 = scmp.eq.s32.totalorder %s28, 0
      %p293 = por %p291, %p292
      %p294 = scmp.ne.s32.totalorder %s286, %s288
      %p295 = scmp.eq.s32.totalorder %s33, 1
      %p296 = por %p294, %p295
      %p297 = scmp.ne.s32.totalorder %s288, %s289
      %p298 = scmp.eq.s32.totalorder %s33, 0
      %p299 = por %p297, %p298
      %p300 = scmp.ne.s32.totalorder %s288, %s289
      %p301 = scmp.eq.s32.totalorder %s34, 1
      %p302 = por %p300, %p301
      %p304 = scmp.ne.s32.totalorder %s289, %s303
      %p305 = scmp.eq.s32.totalorder %s34, 0
      %p306 = por %p304, %p305
      %s307 = ssub.s32 %s35, %s54
      %s308 = ssub.s32 %s36, %s50
      %s309 = sor.u32 %s307, %s308
      %p310 = scmp.eq.s32.totalorder %s309, 0
      %s312 = sadd.s32 %s311, 1
      %s313 = scalar_select %p310, %s311, %s312
      %p316 = pneg %p310
      %p317 = scmp.eq.s32.totalorder %s28, 1
      %p318 = por %p316, %p317
      %p319 = scmp.ne.s32.totalorder %s311, %s314
      %p320 = scmp.eq.s32.totalorder %s28, 0
      %p321 = por %p319, %p320
      %p322 = scmp.ne.s32.totalorder %s311, %s314
      %p323 = scmp.eq.s32.totalorder %s33, 1
      %p324 = por %p322, %p323
      %p325 = scmp.ne.s32.totalorder %s314, %s315
      %p326 = scmp.eq.s32.totalorder %s33, 0
      %p327 = por %p325, %p326
      %p328 = scmp.ne.s32.totalorder %s314, %s315
      %p329 = scmp.eq.s32.totalorder %s34, 1
      %p330 = por %p328, %p329
      %p332 = scmp.ne.s32.totalorder %s315, %s331
      %p333 = scmp.eq.s32.totalorder %s34, 0
      %p334 = por %p332, %p333
      %p335 = scmp.le.s32.totalorder 1, %s28
      %p336 = scmp.lt.s32.totalorder %s28, 3
      %p337 = pnand %p335, %p336
      %p338 = pneg %p337
      // Predicated region
      $region9: #{tpu_custom_call.1} parent=5 // pred_check
        _
      $region10: #{tpu_custom_call.1} parent=5 // pred_check_branch
        %340 = sbr.rel (%p337) target = $region12
      $region11: #{tpu_custom_call.1} parent=5 // pred_region
        %s341 = ssub.s32 %s28, 1
        // Predicated region
        $region13: #{tpu_custom_call.1} parent=11 // pred_check
          %p342 = pneg %p152
        $region14: #{tpu_custom_call.1} parent=11 // pred_check_branch
          %344 = sbr.rel (%p342) target = $region16
        $region15: #{tpu_custom_call.1} parent=11 // pred_region
          %s346 = ssub.s32 512, 512
          %347 = vsyncadd [#allocation13], %s346
          %s348 = sshll.u32 [#allocation12], 4
          %s349 = int_to_ptr.vmem [resolvable:$true] %s348
          %354 = dma.hbm_to_vmem [thread:$0]  %s3, 512, %s349, [#allocation13], 128, 128, 8
        $region16: #{tpu_custom_call.1} parent=11 // pred_fallthru
          _
        // Predicated region
        $region17: #{tpu_custom_call.1} parent=11 // pred_check
          %p355 = pneg %p173
        $region18: #{tpu_custom_call.1} parent=11 // pred_check_branch
          %357 = sbr.rel (%p355) target = $region20
        $region19: #{tpu_custom_call.1} parent=11 // pred_region
          _
        $region20: #{tpu_custom_call.1} parent=11 // pred_fallthru
          _
        // Predicated region
        $region21: #{tpu_custom_call.1} parent=11 // pred_check
          %p358 = pneg %p194
        $region22: #{tpu_custom_call.1} parent=11 // pred_check_branch
          %360 = sbr.rel (%p358) target = $region24
        $region23: #{tpu_custom_call.1} parent=11 // pred_region
          %s362 = ssub.s32 512, 512
          %363 = vsyncadd [#allocation13], %s362
          %s364 = sshll.u32 [#allocation14], 4
          %s365 = int_to_ptr.vmem [resolvable:$true] %s364
          %370 = dma.hbm_to_vmem [thread:$0]  %s5, 512, %s365, [#allocation13], 128, 128, 8
        $region24: #{tpu_custom_call.1} parent=11 // pred_fallthru
          _
        // Predicated region
        $region25: #{tpu_custom_call.1} parent=11 // pred_check
          %p371 = pneg %p215
        $region26: #{tpu_custom_call.1} parent=11 // pred_check_branch
          %373 = sbr.rel (%p371) target = $region28
        $region27: #{tpu_custom_call.1} parent=11 // pred_region
          _
        $region28: #{tpu_custom_call.1} parent=11 // pred_fallthru
          _
        // Predicated region
        $region29: #{tpu_custom_call.1} parent=11 // pred_check
          %p374 = pneg %p236
        $region30: #{tpu_custom_call.1} parent=11 // pred_check_branch
          %376 = sbr.rel (%p374) target = $region32
        $region31: #{tpu_custom_call.1} parent=11 // pred_region
          %s378 = ssub.s32 512, 512
          %379 = vsyncadd [#allocation16], %s378
          %s380 = sshll.u32 [#allocation15], 4
          %s381 = int_to_ptr.vmem [resolvable:$true] %s380
          %386 = dma.hbm_to_vmem [thread:$0]  %s7, 512, %s381, [#allocation16], 128, 128, 8
        $region32: #{tpu_custom_call.1} parent=11 // pred_fallthru
          _
        // Predicated region
        $region33: #{tpu_custom_call.1} parent=11 // pred_check
          %p387 = pneg %p257
        $region34: #{tpu_custom_call.1} parent=11 // pred_check_branch
          %389 = sbr.rel (%p387) target = $region36
        $region35: #{tpu_custom_call.1} parent=11 // pred_region
          _
        $region36: #{tpu_custom_call.1} parent=11 // pred_fallthru
          _
        // Predicated region
        $region37: #{tpu_custom_call.1} parent=11 // pred_check
          %p390 = pneg %p278
        $region38: #{tpu_custom_call.1} parent=11 // pred_check_branch
          %392 = sbr.rel (%p390) target = $region40
        $region39: #{tpu_custom_call.1} parent=11 // pred_region
          %s394 = ssub.s32 512, 512
          %395 = vsyncadd [#allocation16], %s394
          %s396 = sshll.u32 [#allocation17], 4
          %s397 = int_to_ptr.vmem [resolvable:$true] %s396
          %402 = dma.hbm_to_vmem [thread:$0]  %s9, 512, %s397, [#allocation16], 128, 128, 8
        $region40: #{tpu_custom_call.1} parent=11 // pred_fallthru
          _
        // Predicated region
        $region41: #{tpu_custom_call.1} parent=11 // pred_check
          %p403 = pneg %p299
        $region42: #{tpu_custom_call.1} parent=11 // pred_check_branch
          %405 = sbr.rel (%p403) target = $region44
        $region43: #{tpu_custom_call.1} parent=11 // pred_region
          _
        $region44: #{tpu_custom_call.1} parent=11 // pred_fallthru
          _
      $region12: #{tpu_custom_call.1} parent=5 // pred_fallthru
        _
      %p406 = scmp.lt.s32.totalorder %s28, 2
      // Predicated region
      $region45: #{tpu_custom_call.1} parent=5 // pred_check
        %p407 = pneg %p406
      $region46: #{tpu_custom_call.1} parent=5 // pred_check_branch
        %409 = sbr.rel (%p407) target = $region48
      $region47: #{tpu_custom_call.1} parent=5 // pred_region
        // Predicated region
        $region49: #{tpu_custom_call.1} parent=47 // pred_check
          %p410 = pneg %p69
        $region50: #{tpu_custom_call.1} parent=47 // pred_check_branch
          %412 = sbr.rel (%p410) target = $region52
        $region51: #{tpu_custom_call.1} parent=47 // pred_region
          %s413 = sand.u32 %s59, 1
          %s414 = scalar_lea.sflag [#allocation7], %s413
          %s415 = sand.u32 %s59, 1
          %s416 = smul.addr %s415, 8
          %s417 = scalar_lea.vmem [#allocation6], %s416
          %s419 = ssub.s32 128, 128
          %420 = vsyncadd %s414, %s419
          %s421 = sadd.s32 %s36, %s35
          %s422 = smul.addr %s421, 128
          %s423 = scalar_lea.hbm %s0, %s422
          %s425 = sshll.u32 %s417, 4
          %s426 = int_to_ptr.vmem [resolvable:$true] %s425
          %428 = dma.hbm_to_vmem [thread:$0]  %s423, 128, %s426, %s414
        $region52: #{tpu_custom_call.1} parent=47 // pred_fallthru
          _
        // Predicated region
        $region53: #{tpu_custom_call.1} parent=47 // pred_check
          %p429 = pneg %p97
        $region54: #{tpu_custom_call.1} parent=47 // pred_check_branch
          %431 = sbr.rel (%p429) target = $region56
        $region55: #{tpu_custom_call.1} parent=47 // pred_region
          %s432 = sand.u32 %s28, 1
          %s433 = scalar_lea.sflag [#allocation10], %s432
          %s434 = sand.u32 %s87, 1
          %s435 = smul.addr %s434, 8
          %s436 = scalar_lea.vmem [#allocation9], %s435
          %s438 = ssub.s32 128, 128
          %439 = vsyncadd %s433, %s438
          %s440 = sadd.s32 %s37, %s35
          %s441 = smul.addr %s440, 128
          %s442 = scalar_lea.hbm %s1, %s441
          %s444 = sshll.u32 %s436, 4
          %s445 = int_to_ptr.vmem [resolvable:$true] %s444
          %447 = dma.hbm_to_vmem [thread:$0]  %s442, 128, %s445, %s433
        $region56: #{tpu_custom_call.1} parent=47 // pred_fallthru
          _
        // Predicated region
        $region57: #{tpu_custom_call.1} parent=47 // pred_check
          %p448 = pneg %p125
        $region58: #{tpu_custom_call.1} parent=47 // pred_check_branch
          %450 = sbr.rel (%p448) target = $region60
        $region59: #{tpu_custom_call.1} parent=47 // pred_region
          %s451 = sand.u32 %s28, 1
          %s452 = scalar_lea.sflag [#allocation10], %s451
          %s453 = sand.u32 %s115, 1
          %s454 = smul.addr %s453, 8
          %s455 = scalar_lea.vmem [#allocation11], %s454
          %s457 = ssub.s32 128, 128
          %458 = vsyncadd %s452, %s457
          %s459 = sadd.s32 %s37, %s35
          %s460 = smul.addr %s459, 128
          %s461 = scalar_lea.hbm %s2, %s460
          %s463 = sshll.u32 %s455, 4
          %s464 = int_to_ptr.vmem [resolvable:$true] %s463
          %466 = dma.hbm_to_vmem [thread:$0]  %s461, 128, %s464, %s452
        $region60: #{tpu_custom_call.1} parent=47 // pred_fallthru
          _
      $region48: #{tpu_custom_call.1} parent=5 // pred_fallthru
        _
      %p467 = scmp.le.s32.totalorder 1, %s28
      %p468 = scmp.lt.s32.totalorder %s28, 3
      %p469 = pnand %p467, %p468
      %p470 = pneg %p469
      // Predicated region
      $region61: #{tpu_custom_call.1} parent=5 // pred_check
        _
      $region62: #{tpu_custom_call.1} parent=5 // pred_check_branch
        %472 = sbr.rel (%p469) target = $region64
      $region63: #{tpu_custom_call.1} parent=5 // pred_region
        %s473 = ssub.s32 %s28, 1
        %s474 = sand.u32 %s62, 1
        %s475 = scalar_lea.sflag [#allocation7], %s474
        %s476 = sand.u32 %s62, 1
        %s477 = smul.addr %s476, 8
        %s478 = scalar_lea.vmem [#allocation6], %s477
        // Predicated region
        $region65: #{tpu_custom_call.1} parent=63 // pred_check
          %p479 = pneg %p75
        $region66: #{tpu_custom_call.1} parent=63 // pred_check_branch
          %481 = sbr.rel (%p479) target = $region68
        $region67: #{tpu_custom_call.1} parent=63 // pred_region
          %482 = dma.done %s475, 128
        $region68: #{tpu_custom_call.1} parent=63 // pred_fallthru
          _
        %s483 = sand.u32 %s33, 1
        %s484 = scalar_lea.sflag [#allocation10], %s483
        %s485 = sand.u32 %s90, 1
        %s486 = smul.addr %s485, 8
        %s487 = scalar_lea.vmem [#allocation9], %s486
        // Predicated region
        $region69: #{tpu_custom_call.1} parent=63 // pred_check
          %p488 = pneg %p103
        $region70: #{tpu_custom_call.1} parent=63 // pred_check_branch
          %490 = sbr.rel (%p488) target = $region72
        $region71: #{tpu_custom_call.1} parent=63 // pred_region
          %491 = dma.done %s484, 128
        $region72: #{tpu_custom_call.1} parent=63 // pred_fallthru
          _
        %s492 = sand.u32 %s33, 1
        %s493 = scalar_lea.sflag [#allocation10], %s492
        %s494 = sand.u32 %s118, 1
        %s495 = smul.addr %s494, 8
        %s496 = scalar_lea.vmem [#allocation11], %s495
        // Predicated region
        $region73: #{tpu_custom_call.1} parent=63 // pred_check
          %p497 = pneg %p131
        $region74: #{tpu_custom_call.1} parent=63 // pred_check_branch
          %499 = sbr.rel (%p497) target = $region76
        $region75: #{tpu_custom_call.1} parent=63 // pred_region
          %500 = dma.done %s493, 128
        $region76: #{tpu_custom_call.1} parent=63 // pred_fallthru
          _
        // Predicated region
        $region77: #{tpu_custom_call.1} parent=63 // pred_check
          %p501 = pneg %p152
        $region78: #{tpu_custom_call.1} parent=63 // pred_check_branch
          %503 = sbr.rel (%p501) target = $region80
        $region79: #{tpu_custom_call.1} parent=63 // pred_region
          %504 = dma.done [#allocation13], 512
        $region80: #{tpu_custom_call.1} parent=63 // pred_fallthru
          _
        // Predicated region
        $region81: #{tpu_custom_call.1} parent=63 // pred_check
          %p505 = pneg %p194
        $region82: #{tpu_custom_call.1} parent=63 // pred_check_branch
          %507 = sbr.rel (%p505) target = $region84
        $region83: #{tpu_custom_call.1} parent=63 // pred_region
          %508 = dma.done [#allocation13], 512
        $region84: #{tpu_custom_call.1} parent=63 // pred_fallthru
          _
        // Predicated region
        $region85: #{tpu_custom_call.1} parent=63 // pred_check
          %p509 = pneg %p236
        $region86: #{tpu_custom_call.1} parent=63 // pred_check_branch
          %511 = sbr.rel (%p509) target = $region88
        $region87: #{tpu_custom_call.1} parent=63 // pred_region
          %512 = dma.done [#allocation16], 512
        $region88: #{tpu_custom_call.1} parent=63 // pred_fallthru
          _
        // Predicated region
        $region89: #{tpu_custom_call.1} parent=63 // pred_check
          %p513 = pneg %p278
        $region90: #{tpu_custom_call.1} parent=63 // pred_check_branch
          %515 = sbr.rel (%p513) target = $region92
        $region91: #{tpu_custom_call.1} parent=63 // pred_region
          %516 = dma.done [#allocation16], 512
        $region92: #{tpu_custom_call.1} parent=63 // pred_fallthru
          _
        %s517 = sand.u32 %s62, 1
        %s518 = scalar_lea.sflag [#allocation7], %s517
        %s519 = sand.u32 %s62, 1
        %s520 = smul.addr %s519, 8
        %s521 = scalar_lea.vmem [#allocation6], %s520
        %p522 = pneg %p75
        %p523 = pneg %p72
        %s524 = sand.u32 %s33, 1
        %s525 = scalar_lea.sflag [#allocation10], %s524
        %s526 = sand.u32 %s90, 1
        %s527 = smul.addr %s526, 8
        %s528 = scalar_lea.vmem [#allocation9], %s527
        %p529 = pneg %p103
        %p530 = pneg %p100
        %s531 = sand.u32 %s33, 1
        %s532 = scalar_lea.sflag [#allocation10], %s531
        %s533 = sand.u32 %s118, 1
        %s534 = smul.addr %s533, 8
        %s535 = scalar_lea.vmem [#allocation11], %s534
        %p536 = pneg %p131
        %p537 = pneg %p128
        %p538 = pneg %p152
        %p539 = pneg %p149
        %p540 = pneg %p173
        %p541 = pneg %p170
        %p542 = pneg %p194
        %p543 = pneg %p191
        %p544 = pneg %p215
        %p545 = pneg %p212
        %p546 = pneg %p236
        %p547 = pneg %p233
        %p548 = pneg %p257
        %p549 = pneg %p254
        %p550 = pneg %p278
        %p551 = pneg %p275
        %p552 = pneg %p299
        %p553 = pneg %p296
        %p554 = pneg %p327
        %p555 = pneg %p324
        %s556 = sand.u32 %s314, 1
        %s557 = scalar_lea.sflag [#allocation8], %s556
        %s558 = sand.u32 %s314, 1
        %s559 = smul.addr %s558, 8
        %s560 = scalar_lea.vmem [#allocation18], %s559
        %p561 = scmp.eq.s32.totalorder %s40, 0
        // Predicated region
        $region93: #{tpu_custom_call.1} parent=63 // pred_check
          %p562 = pneg %p561
        $region94: #{tpu_custom_call.1} parent=63 // pred_check_branch
          %564 = sbr.rel (%p562) target = $region96
        $region95: #{tpu_custom_call.1} parent=63 // pred_region
          %v565 = vld [vmem:[%s478] sm:$0xff]
          %v566 = vld [vmem:[#allocation12] sm:$0xff]
          %v567 = vld [vmem:[#allocation12 + $0x8] sm:$0xff]
          %v568 = vld [vmem:[#allocation12 + $0x10] sm:$0xff]
          %v569 = vld [vmem:[#allocation12 + $0x18] sm:$0xff]
          %v570 = vld [vmem:[%s4] sm:$0x1]
          %v572 = vlaneseq
          %v573 = vshrl.u32 %v572, 7
          %v574 = vsub.s32 0, %v573
          %v575 = vrot.slane %v570, %v574
          %vm577 = vcmask 261120
          %v579 = vsel %vm577, %v565, 0
          %581 = vmatprep.subr.mxu0 0.0
          %582 = vmatpush1.msra.mxu0 0.0
          %583 = vmatprep.subr.mxu0 0.0
          %584 = vmatpush1.msra.mxu0 0.0
          %585 = vmatprep.subr.mxu0 0.0
          %586 = vmatpush1.msra.mxu0 0.0
          %587 = vmatprep.subr.mxu0 0.0
          %588 = vmatpush1.msra.mxu0 0.0
          %589 = vmatprep.subr.mxu0 0.0
          %590 = vmatpush1.msra.mxu0 0.0
          %591 = vmatprep.subr.mxu0 0.0
          %592 = vmatpush1.msra.mxu0 0.0
          %593 = vmatprep.subr.mxu0 0.0
          %594 = vmatpush1.msra.mxu0 0.0
          %595 = vmatprep.subr.mxu0 0.0
          %596 = vmatpush1.msra.mxu0 0.0
          %597 = vmatprep.subr.mxu0 0.0
          %598 = vmatpush1.msra.mxu0 0.0
          %599 = vmatprep.subr.mxu0 0.0
          %600 = vmatpush1.msra.mxu0 0.0
          %601 = vmatprep.subr.mxu0 0.0
          %602 = vmatpush1.msra.mxu0 0.0
          %603 = vmatprep.subr.mxu0 0.0
          %604 = vmatpush1.msra.mxu0 0.0
          %605 = vmatprep.subr.mxu0 0.0
          %606 = vmatpush1.msra.mxu0 %v569
          %607 = vmatprep.subr.mxu0 0.0
          %608 = vmatpush1.msra.mxu0 %v568
          %609 = vmatprep.subr.mxu0 0.0
          %610 = vmatpush1.msra.mxu0 %v567
          %611 = vmatprep.subr.mxu0 0.0
          %612 = vmatpush1.msra.mxu0 %v566
          %613 = vmatprep.subr.mxu0 0.0
          %614 = vmatpush2.msra.mxu0 0.0
          %615 = vmatprep.subr.mxu0 0.0
          %616 = vmatpush2.msra.mxu0 0.0
          %617 = vmatprep.subr.mxu0 0.0
          %618 = vmatpush2.msra.mxu0 0.0
          %619 = vmatprep.subr.mxu0 0.0
          %620 = vmatpush2.msra.mxu0 0.0
          %621 = vmatprep.subr.mxu0 0.0
          %622 = vmatpush2.msra.mxu0 0.0
          %623 = vmatprep.subr.mxu0 0.0
          %624 = vmatpush2.msra.mxu0 0.0
          %625 = vmatprep.subr.mxu0 0.0
          %626 = vmatpush2.msra.mxu0 0.0
          %627 = vmatprep.subr.mxu0 0.0
          %628 = vmatpush2.msra.mxu0 0.0
          %629 = vmatprep.subr.mxu0 0.0
          %630 = vmatpush2.msra.mxu0 0.0
          %631 = vmatprep.subr.mxu0 0.0
          %632 = vmatpush2.msra.mxu0 0.0
          %633 = vmatprep.subr.mxu0 0.0
          %634 = vmatpush2.msra.mxu0 0.0
          %635 = vmatprep.subr.mxu0 0.0
          %636 = vmatpush2.msra.mxu0 0.0
          %637 = vmatprep.subr.mxu0 0.0
          %638 = vmatpush2.msra.mxu0 0.0
          %639 = vmatprep.subr.mxu0 0.0
          %640 = vmatpush2.msra.mxu0 0.0
          %641 = vmatprep.subr.mxu0 0.0
          %642 = vmatpush2.msra.mxu0 0.0
          %643 = vmatprep.subr.mxu0 0.0
          %644 = vmatpush2.msra.mxu0 0.0
          %645 = vmatprep.mubr.f32.mxu0 0.0
          %646 = vmatmul.mubr.f32.gmra.mxu0 %v579
          %v647 = vpop.f32.mrf.mxu0
          %v648 = vadd.f32 %v575, %v647
          %v649 = vpop.f32.mrf.mxu0
          %650 = vdwg.mxu0
          %652 = vrot.lane.b32.xlu0 %v648, 120
          %v653 = vpop.permute.xlu0 %652
          %655 = vrot.lane.b32.xlu0 %v648, 112
          %v656 = vpop.permute.xlu0 %655
          %658 = vrot.lane.b32.xlu0 %v648, 104
          %v659 = vpop.permute.xlu0 %658
          %v661 = vcombine.low %v648, %v656
          %v662 = vcombine.high %v648, %v656
          %v664 = vunpack.c.l.s4 1983009808
          %v665 = vunpack.c.0.s8 %v664
          %v666 = vlaneseq
          %v667 = vshrl.u32 %v666, 7
          %v668 = vsub.s32 %v665, %v667
          %v669 = vrot.slane %v661, %v668
          %v671 = vunpack.c.l.s4 1983009808
          %v672 = vunpack.c.0.s8 %v671
          %v673 = vlaneseq
          %v674 = vshrl.u32 %v673, 7
          %v675 = vsub.s32 %v672, %v674
          %v676 = vrot.slane %v662, %v675
          %v677 = vcombine.low %v653, %v659
          %v678 = vcombine.high %v653, %v659
          %v680 = vunpack.c.l.s4 1983009808
          %v681 = vunpack.c.0.s8 %v680
          %v682 = vlaneseq
          %v683 = vshrl.u32 %v682, 7
          %v684 = vsub.s32 %v681, %v683
          %v685 = vrot.slane %v677, %v684
          %v687 = vunpack.c.l.s4 1983009808
          %v688 = vunpack.c.0.s8 %v687
          %v689 = vlaneseq
          %v690 = vshrl.u32 %v689, 7
          %v691 = vsub.s32 %v688, %v690
          %v692 = vrot.slane %v678, %v691
          %v693 = vcombine.low %v669, %v685
          %v694 = vcombine.high %v669, %v685
          %v696 = vunpack.c.l.s4 1934713408
          %v697 = vunpack.c.0.s8 %v696
          %v698 = vlaneseq
          %v699 = vshrl.u32 %v698, 7
          %v700 = vsub.s32 %v697, %v699
          %v701 = vrot.slane %v693, %v700
          %v703 = vunpack.c.l.s4 1934713408
          %v704 = vunpack.c.0.s8 %v703
          %v705 = vlaneseq
          %v706 = vshrl.u32 %v705, 7
          %v707 = vsub.s32 %v704, %v706
          %v708 = vrot.slane %v694, %v707
          %v709 = vcombine.low %v676, %v692
          %v710 = vcombine.high %v676, %v692
          %v712 = vunpack.c.l.s4 1934713408
          %v713 = vunpack.c.0.s8 %v712
          %v714 = vlaneseq
          %v715 = vshrl.u32 %v714, 7
          %v716 = vsub.s32 %v713, %v715
          %v717 = vrot.slane %v709, %v716
          %v719 = vunpack.c.l.s4 1934713408
          %v720 = vunpack.c.0.s8 %v719
          %v721 = vlaneseq
          %v722 = vshrl.u32 %v721, 7
          %v723 = vsub.s32 %v720, %v722
          %v724 = vrot.slane %v710, %v723
          %v725 = vcombine.high %v701, 0.0
          %v726 = vcombine.high %v708, 0.0
          %v727 = vcombine.high %v717, 0.0
          %v728 = vcombine.high %v724, 0.0
          %v729 = vcombine.low %v701, %v708
          %v731 = vunpack.c.l.s4 1983009808
          %v732 = vunpack.c.0.s8 %v731
          %v733 = vlaneseq
          %v734 = vshrl.u32 %v733, 7
          %v735 = vsub.s32 %v732, %v734
          %v736 = vrot.slane %v729, %v735
          %v737 = vcombine.low %v725, %v726
          %v739 = vunpack.c.l.s4 1983009808
          %v740 = vunpack.c.0.s8 %v739
          %v741 = vlaneseq
          %v742 = vshrl.u32 %v741, 7
          %v743 = vsub.s32 %v740, %v742
          %v744 = vrot.slane %v737, %v743
          %v745 = vcombine.low %v717, %v724
          %v747 = vunpack.c.l.s4 1983009808
          %v748 = vunpack.c.0.s8 %v747
          %v749 = vlaneseq
          %v750 = vshrl.u32 %v749, 7
          %v751 = vsub.s32 %v748, %v750
          %v752 = vrot.slane %v745, %v751
          %v753 = vcombine.low %v727, %v728
          %v755 = vunpack.c.l.s4 1983009808
          %v756 = vunpack.c.0.s8 %v755
          %v757 = vlaneseq
          %v758 = vshrl.u32 %v757, 7
          %v759 = vsub.s32 %v756, %v758
          %v760 = vrot.slane %v753, %v759
          %v761 = vcombine.low %v736, %v744
          %v762 = vcombine.high %v736, %v744
          %v764 = vunpack.c.l.s4 1934713408
          %v765 = vunpack.c.0.s8 %v764
          %v766 = vlaneseq
          %v767 = vshrl.u32 %v766, 7
          %v768 = vsub.s32 %v765, %v767
          %v769 = vrot.slane %v761, %v768
          %v771 = vunpack.c.l.s4 1934713408
          %v772 = vunpack.c.0.s8 %v771
          %v773 = vlaneseq
          %v774 = vshrl.u32 %v773, 7
          %v775 = vsub.s32 %v772, %v774
          %v776 = vrot.slane %v762, %v775
          %v777 = vcombine.low %v752, %v760
          %v778 = vcombine.high %v752, %v760
          %v780 = vunpack.c.l.s4 1934713408
          %v781 = vunpack.c.0.s8 %v780
          %v782 = vlaneseq
          %v783 = vshrl.u32 %v782, 7
          %v784 = vsub.s32 %v781, %v783
          %v785 = vrot.slane %v777, %v784
          %v787 = vunpack.c.l.s4 1934713408
          %v788 = vunpack.c.0.s8 %v787
          %v789 = vlaneseq
          %v790 = vshrl.u32 %v789, 7
          %v791 = vsub.s32 %v788, %v790
          %v792 = vrot.slane %v778, %v791
          %v793 = vcombine.low %v769, %v785
          %v794 = vcombine.high %v769, %v785
          %v795 = vcombine.low %v776, %v792
          %v796 = vcombine.high %v776, %v792
          %vm797 = vcmask 64512
          %798 = vst.msk [vmem:[#allocation2] sm:$0xff] %vm797, %v793
          %799 = vst.msk [vmem:[#allocation2 + $0x8] sm:$0xff] %vm797, %v794
          %800 = vst.msk [vmem:[#allocation2 + $0x10] sm:$0xff] %vm797, %v795
          %801 = vst.msk [vmem:[#allocation2 + $0x18] sm:$0xff] %vm797, %v796
          %vm802 = vcmask 7168
          %803 = vst.msk [vmem:[#allocation3] sm:$0xff] %vm802, -inf
          %804 = vst.msk [vmem:[#allocation3 + $0x8] sm:$0xff] %vm802, -inf
          %805 = vst.msk [vmem:[#allocation3 + $0x10] sm:$0xff] %vm802, -inf
          %806 = vst.msk [vmem:[#allocation3 + $0x18] sm:$0xff] %vm802, -inf
          %807 = vst.msk [vmem:[#allocation4] sm:$0xff] %vm802, 0.0
          %808 = vst.msk [vmem:[#allocation4 + $0x8] sm:$0xff] %vm802, 0.0
          %809 = vst.msk [vmem:[#allocation4 + $0x10] sm:$0xff] %vm802, 0.0
          %810 = vst.msk [vmem:[#allocation4 + $0x18] sm:$0xff] %vm802, 0.0
          %811 = vst.msk [vmem:[#allocation5] sm:$0xff] %vm797, 0.0
          %812 = vst.msk [vmem:[#allocation5 + $0x8] sm:$0xff] %vm797, 0.0
          %813 = vst.msk [vmem:[#allocation5 + $0x10] sm:$0xff] %vm797, 0.0
          %814 = vst.msk [vmem:[#allocation5 + $0x18] sm:$0xff] %vm797, 0.0
        $region96: #{tpu_custom_call.1} parent=63 // pred_fallthru
          _
        %v815 = vld [vmem:[%s487] sm:$0xff]
        %v816 = vld [vmem:[%s496] sm:$0xff]
        %v817 = vld [vmem:[#allocation14] sm:$0xff]
        %v818 = vld [vmem:[#allocation14 + $0x8] sm:$0xff]
        %v819 = vld [vmem:[#allocation14 + $0x10] sm:$0xff]
        %v820 = vld [vmem:[#allocation14 + $0x18] sm:$0xff]
        %v821 = vld [vmem:[%s6] sm:$0x1]
        %v823 = vlaneseq
        %v824 = vshrl.u32 %v823, 7
        %v825 = vsub.s32 0, %v824
        %v826 = vrot.slane %v821, %v825
        %vm828 = vcmask 261120
        %v830 = vsel %vm828, %v815, 0
        %832 = vmatprep.subr.mxu0 0.0
        %833 = vmatpush1.msra.mxu0 0.0
        %834 = vmatprep.subr.mxu0 0.0
        %835 = vmatpush1.msra.mxu0 0.0
        %836 = vmatprep.subr.mxu0 0.0
        %837 = vmatpush1.msra.mxu0 0.0
        %838 = vmatprep.subr.mxu0 0.0
        %839 = vmatpush1.msra.mxu0 0.0
        %840 = vmatprep.subr.mxu0 0.0
        %841 = vmatpush1.msra.mxu0 0.0
        %842 = vmatprep.subr.mxu0 0.0
        %843 = vmatpush1.msra.mxu0 0.0
        %844 = vmatprep.subr.mxu0 0.0
        %845 = vmatpush1.msra.mxu0 0.0
        %846 = vmatprep.subr.mxu0 0.0
        %847 = vmatpush1.msra.mxu0 0.0
        %848 = vmatprep.subr.mxu0 0.0
        %849 = vmatpush1.msra.mxu0 0.0
        %850 = vmatprep.subr.mxu0 0.0
        %851 = vmatpush1.msra.mxu0 0.0
        %852 = vmatprep.subr.mxu0 0.0
        %853 = vmatpush1.msra.mxu0 0.0
        %854 = vmatprep.subr.mxu0 0.0
        %855 = vmatpush1.msra.mxu0 0.0
        %856 = vmatprep.subr.mxu0 0.0
        %857 = vmatpush1.msra.mxu0 %v820
        %858 = vmatprep.subr.mxu0 0.0
        %859 = vmatpush1.msra.mxu0 %v819
        %860 = vmatprep.subr.mxu0 0.0
        %861 = vmatpush1.msra.mxu0 %v818
        %862 = vmatprep.subr.mxu0 0.0
        %863 = vmatpush1.msra.mxu0 %v817
        %864 = vmatprep.subr.mxu0 0.0
        %865 = vmatpush2.msra.mxu0 0.0
        %866 = vmatprep.subr.mxu0 0.0
        %867 = vmatpush2.msra.mxu0 0.0
        %868 = vmatprep.subr.mxu0 0.0
        %869 = vmatpush2.msra.mxu0 0.0
        %870 = vmatprep.subr.mxu0 0.0
        %871 = vmatpush2.msra.mxu0 0.0
        %872 = vmatprep.subr.mxu0 0.0
        %873 = vmatpush2.msra.mxu0 0.0
        %874 = vmatprep.subr.mxu0 0.0
        %875 = vmatpush2.msra.mxu0 0.0
        %876 = vmatprep.subr.mxu0 0.0
        %877 = vmatpush2.msra.mxu0 0.0
        %878 = vmatprep.subr.mxu0 0.0
        %879 = vmatpush2.msra.mxu0 0.0
        %880 = vmatprep.subr.mxu0 0.0
        %881 = vmatpush2.msra.mxu0 0.0
        %882 = vmatprep.subr.mxu0 0.0
        %883 = vmatpush2.msra.mxu0 0.0
        %884 = vmatprep.subr.mxu0 0.0
        %885 = vmatpush2.msra.mxu0 0.0
        %886 = vmatprep.subr.mxu0 0.0
        %887 = vmatpush2.msra.mxu0 0.0
        %888 = vmatprep.subr.mxu0 0.0
        %889 = vmatpush2.msra.mxu0 0.0
        %890 = vmatprep.subr.mxu0 0.0
        %891 = vmatpush2.msra.mxu0 0.0
        %892 = vmatprep.subr.mxu0 0.0
        %893 = vmatpush2.msra.mxu0 0.0
        %894 = vmatprep.subr.mxu0 0.0
        %895 = vmatpush2.msra.mxu0 0.0
        %896 = vmatprep.mubr.f32.mxu0 0.0
        %897 = vmatmul.mubr.f32.gmra.mxu0 %v830
        %v898 = vpop.f32.mrf.mxu0
        %v899 = vadd.f32 %v826, %v898
        %v900 = vpop.f32.mrf.mxu0
        %901 = vdwg.mxu0
        %903 = vrot.lane.b32.xlu0 %v899, 120
        %v904 = vpop.permute.xlu0 %903
        %906 = vrot.lane.b32.xlu0 %v899, 112
        %v907 = vpop.permute.xlu0 %906
        %909 = vrot.lane.b32.xlu0 %v899, 104
        %v910 = vpop.permute.xlu0 %909
        %v912 = vcombine.low %v899, %v907
        %v913 = vcombine.high %v899, %v907
        %v915 = vunpack.c.l.s4 1983009808
        %v916 = vunpack.c.0.s8 %v915
        %v917 = vlaneseq
        %v918 = vshrl.u32 %v917, 7
        %v919 = vsub.s32 %v916, %v918
        %v920 = vrot.slane %v912, %v919
        %v922 = vunpack.c.l.s4 1983009808
        %v923 = vunpack.c.0.s8 %v922
        %v924 = vlaneseq
        %v925 = vshrl.u32 %v924, 7
        %v926 = vsub.s32 %v923, %v925
        %v927 = vrot.slane %v913, %v926
        %v928 = vcombine.low %v904, %v910
        %v929 = vcombine.high %v904, %v910
        %v931 = vunpack.c.l.s4 1983009808
        %v932 = vunpack.c.0.s8 %v931
        %v933 = vlaneseq
        %v934 = vshrl.u32 %v933, 7
        %v935 = vsub.s32 %v932, %v934
        %v936 = vrot.slane %v928, %v935
        %v938 = vunpack.c.l.s4 1983009808
        %v939 = vunpack.c.0.s8 %v938
        %v940 = vlaneseq
        %v941 = vshrl.u32 %v940, 7
        %v942 = vsub.s32 %v939, %v941
        %v943 = vrot.slane %v929, %v942
        %v944 = vcombine.low %v920, %v936
        %v945 = vcombine.high %v920, %v936
        %v947 = vunpack.c.l.s4 1934713408
        %v948 = vunpack.c.0.s8 %v947
        %v949 = vlaneseq
        %v950 = vshrl.u32 %v949, 7
        %v951 = vsub.s32 %v948, %v950
        %v952 = vrot.slane %v944, %v951
        %v954 = vunpack.c.l.s4 1934713408
        %v955 = vunpack.c.0.s8 %v954
        %v956 = vlaneseq
        %v957 = vshrl.u32 %v956, 7
        %v958 = vsub.s32 %v955, %v957
        %v959 = vrot.slane %v945, %v958
        %v960 = vcombine.low %v927, %v943
        %v961 = vcombine.high %v927, %v943
        %v963 = vunpack.c.l.s4 1934713408
        %v964 = vunpack.c.0.s8 %v963
        %v965 = vlaneseq
        %v966 = vshrl.u32 %v965, 7
        %v967 = vsub.s32 %v964, %v966
        %v968 = vrot.slane %v960, %v967
        %v970 = vunpack.c.l.s4 1934713408
        %v971 = vunpack.c.0.s8 %v970
        %v972 = vlaneseq
        %v973 = vshrl.u32 %v972, 7
        %v974 = vsub.s32 %v971, %v973
        %v975 = vrot.slane %v961, %v974
        %v976 = vcombine.high %v952, 0.0
        %v977 = vcombine.high %v959, 0.0
        %v978 = vcombine.high %v968, 0.0
        %v979 = vcombine.high %v975, 0.0
        %v980 = vcombine.low %v952, %v959
        %v982 = vunpack.c.l.s4 1983009808
        %v983 = vunpack.c.0.s8 %v982
        %v984 = vlaneseq
        %v985 = vshrl.u32 %v984, 7
        %v986 = vsub.s32 %v983, %v985
        %v987 = vrot.slane %v980, %v986
        %v988 = vcombine.low %v976, %v977
        %v990 = vunpack.c.l.s4 1983009808
        %v991 = vunpack.c.0.s8 %v990
        %v992 = vlaneseq
        %v993 = vshrl.u32 %v992, 7
        %v994 = vsub.s32 %v991, %v993
        %v995 = vrot.slane %v988, %v994
        %v996 = vcombine.low %v968, %v975
        %v998 = vunpack.c.l.s4 1983009808
        %v999 = vunpack.c.0.s8 %v998
        %v1000 = vlaneseq
        %v1001 = vshrl.u32 %v1000, 7
        %v1002 = vsub.s32 %v999, %v1001
        %v1003 = vrot.slane %v996, %v1002
        %v1004 = vcombine.low %v978, %v979
        %v1006 = vunpack.c.l.s4 1983009808
        %v1007 = vunpack.c.0.s8 %v1006
        %v1008 = vlaneseq
        %v1009 = vshrl.u32 %v1008, 7
        %v1010 = vsub.s32 %v1007, %v1009
        %v1011 = vrot.slane %v1004, %v1010
        %v1012 = vcombine.low %v987, %v995
        %v1013 = vcombine.high %v987, %v995
        %v1015 = vunpack.c.l.s4 1934713408
        %v1016 = vunpack.c.0.s8 %v1015
        %v1017 = vlaneseq
        %v1018 = vshrl.u32 %v1017, 7
        %v1019 = vsub.s32 %v1016, %v1018
        %v1020 = vrot.slane %v1012, %v1019
        %v1022 = vunpack.c.l.s4 1934713408
        %v1023 = vunpack.c.0.s8 %v1022
        %v1024 = vlaneseq
        %v1025 = vshrl.u32 %v1024, 7
        %v1026 = vsub.s32 %v1023, %v1025
        %v1027 = vrot.slane %v1013, %v1026
        %v1028 = vcombine.low %v1003, %v1011
        %v1029 = vcombine.high %v1003, %v1011
        %v1031 = vunpack.c.l.s4 1934713408
        %v1032 = vunpack.c.0.s8 %v1031
        %v1033 = vlaneseq
        %v1034 = vshrl.u32 %v1033, 7
        %v1035 = vsub.s32 %v1032, %v1034
        %v1036 = vrot.slane %v1028, %v1035
        %v1038 = vunpack.c.l.s4 1934713408
        %v1039 = vunpack.c.0.s8 %v1038
        %v1040 = vlaneseq
        %v1041 = vshrl.u32 %v1040, 7
        %v1042 = vsub.s32 %v1039, %v1041
        %v1043 = vrot.slane %v1029, %v1042
        %v1044 = vcombine.low %v1020, %v1036
        %v1045 = vcombine.high %v1020, %v1036
        %v1046 = vcombine.low %v1027, %v1043
        %v1047 = vcombine.high %v1027, %v1043
        %v1048 = vld [vmem:[#allocation15] sm:$0xff]
        %v1049 = vld [vmem:[#allocation15 + $0x8] sm:$0xff]
        %v1050 = vld [vmem:[#allocation15 + $0x10] sm:$0xff]
        %v1051 = vld [vmem:[#allocation15 + $0x18] sm:$0xff]
        %v1052 = vld [vmem:[%s8] sm:$0x1]
        %v1054 = vlaneseq
        %v1055 = vshrl.u32 %v1054, 7
        %v1056 = vsub.s32 0, %v1055
        %v1057 = vrot.slane %v1052, %v1056
        %v1060 = vsel %vm828, %v816, 0
        %1062 = vmatprep.subr.mxu0 0.0
        %1063 = vmatpush1.msra.mxu0 0.0
        %1064 = vmatprep.subr.mxu0 0.0
        %1065 = vmatpush1.msra.mxu0 0.0
        %1066 = vmatprep.subr.mxu0 0.0
        %1067 = vmatpush1.msra.mxu0 0.0
        %1068 = vmatprep.subr.mxu0 0.0
        %1069 = vmatpush1.msra.mxu0 0.0
        %1070 = vmatprep.subr.mxu0 0.0
        %1071 = vmatpush1.msra.mxu0 0.0
        %1072 = vmatprep.subr.mxu0 0.0
        %1073 = vmatpush1.msra.mxu0 0.0
        %1074 = vmatprep.subr.mxu0 0.0
        %1075 = vmatpush1.msra.mxu0 0.0
        %1076 = vmatprep.subr.mxu0 0.0
        %1077 = vmatpush1.msra.mxu0 0.0
        %1078 = vmatprep.subr.mxu0 0.0
        %1079 = vmatpush1.msra.mxu0 0.0
        %1080 = vmatprep.subr.mxu0 0.0
        %1081 = vmatpush1.msra.mxu0 0.0
        %1082 = vmatprep.subr.mxu0 0.0
        %1083 = vmatpush1.msra.mxu0 0.0
        %1084 = vmatprep.subr.mxu0 0.0
        %1085 = vmatpush1.msra.mxu0 0.0
        %1086 = vmatprep.subr.mxu0 0.0
        %1087 = vmatpush1.msra.mxu0 %v1051
        %1088 = vmatprep.subr.mxu0 0.0
        %1089 = vmatpush1.msra.mxu0 %v1050
        %1090 = vmatprep.subr.mxu0 0.0
        %1091 = vmatpush1.msra.mxu0 %v1049
        %1092 = vmatprep.subr.mxu0 0.0
        %1093 = vmatpush1.msra.mxu0 %v1048
        %1094 = vmatprep.subr.mxu0 0.0
        %1095 = vmatpush2.msra.mxu0 0.0
        %1096 = vmatprep.subr.mxu0 0.0
        %1097 = vmatpush2.msra.mxu0 0.0
        %1098 = vmatprep.subr.mxu0 0.0
        %1099 = vmatpush2.msra.mxu0 0.0
        %1100 = vmatprep.subr.mxu0 0.0
        %1101 = vmatpush2.msra.mxu0 0.0
        %1102 = vmatprep.subr.mxu0 0.0
        %1103 = vmatpush2.msra.mxu0 0.0
        %1104 = vmatprep.subr.mxu0 0.0
        %1105 = vmatpush2.msra.mxu0 0.0
        %1106 = vmatprep.subr.mxu0 0.0
        %1107 = vmatpush2.msra.mxu0 0.0
        %1108 = vmatprep.subr.mxu0 0.0
        %1109 = vmatpush2.msra.mxu0 0.0
        %1110 = vmatprep.subr.mxu0 0.0
        %1111 = vmatpush2.msra.mxu0 0.0
        %1112 = vmatprep.subr.mxu0 0.0
        %1113 = vmatpush2.msra.mxu0 0.0
        %1114 = vmatprep.subr.mxu0 0.0
        %1115 = vmatpush2.msra.mxu0 0.0
        %1116 = vmatprep.subr.mxu0 0.0
        %1117 = vmatpush2.msra.mxu0 0.0
        %1118 = vmatprep.subr.mxu0 0.0
        %1119 = vmatpush2.msra.mxu0 0.0
        %1120 = vmatprep.subr.mxu0 0.0
        %1121 = vmatpush2.msra.mxu0 0.0
        %1122 = vmatprep.subr.mxu0 0.0
        %1123 = vmatpush2.msra.mxu0 0.0
        %1124 = vmatprep.subr.mxu0 0.0
        %1125 = vmatpush2.msra.mxu0 0.0
        %1126 = vmatprep.mubr.f32.mxu0 0.0
        %1127 = vmatmul.mubr.f32.gmra.mxu0 %v1060
        %v1128 = vpop.f32.mrf.mxu0
        %v1129 = vadd.f32 %v1057, %v1128
        %v1130 = vpop.f32.mrf.mxu0
        %1131 = vdwg.mxu0
        %1133 = vrot.lane.b32.xlu0 %v1129, 120
        %v1134 = vpop.permute.xlu0 %1133
        %1136 = vrot.lane.b32.xlu0 %v1129, 112
        %v1137 = vpop.permute.xlu0 %1136
        %1139 = vrot.lane.b32.xlu0 %v1129, 104
        %v1140 = vpop.permute.xlu0 %1139
        %v1142 = vcombine.low %v1129, %v1137
        %v1143 = vcombine.high %v1129, %v1137
        %v1145 = vunpack.c.l.s4 1983009808
        %v1146 = vunpack.c.0.s8 %v1145
        %v1147 = vlaneseq
        %v1148 = vshrl.u32 %v1147, 7
        %v1149 = vsub.s32 %v1146, %v1148
        %v1150 = vrot.slane %v1142, %v1149
        %v1152 = vunpack.c.l.s4 1983009808
        %v1153 = vunpack.c.0.s8 %v1152
        %v1154 = vlaneseq
        %v1155 = vshrl.u32 %v1154, 7
        %v1156 = vsub.s32 %v1153, %v1155
        %v1157 = vrot.slane %v1143, %v1156
        %v1158 = vcombine.low %v1134, %v1140
        %v1159 = vcombine.high %v1134, %v1140
        %v1161 = vunpack.c.l.s4 1983009808
        %v1162 = vunpack.c.0.s8 %v1161
        %v1163 = vlaneseq
        %v1164 = vshrl.u32 %v1163, 7
        %v1165 = vsub.s32 %v1162, %v1164
        %v1166 = vrot.slane %v1158, %v1165
        %v1168 = vunpack.c.l.s4 1983009808
        %v1169 = vunpack.c.0.s8 %v1168
        %v1170 = vlaneseq
        %v1171 = vshrl.u32 %v1170, 7
        %v1172 = vsub.s32 %v1169, %v1171
        %v1173 = vrot.slane %v1159, %v1172
        %v1174 = vcombine.low %v1150, %v1166
        %v1175 = vcombine.high %v1150, %v1166
        %v1177 = vunpack.c.l.s4 1934713408
        %v1178 = vunpack.c.0.s8 %v1177
        %v1179 = vlaneseq
        %v1180 = vshrl.u32 %v1179, 7
        %v1181 = vsub.s32 %v1178, %v1180
        %v1182 = vrot.slane %v1174, %v1181
        %v1184 = vunpack.c.l.s4 1934713408
        %v1185 = vunpack.c.0.s8 %v1184
        %v1186 = vlaneseq
        %v1187 = vshrl.u32 %v1186, 7
        %v1188 = vsub.s32 %v1185, %v1187
        %v1189 = vrot.slane %v1175, %v1188
        %v1190 = vcombine.low %v1157, %v1173
        %v1191 = vcombine.high %v1157, %v1173
        %v1193 = vunpack.c.l.s4 1934713408
        %v1194 = vunpack.c.0.s8 %v1193
        %v1195 = vlaneseq
        %v1196 = vshrl.u32 %v1195, 7
        %v1197 = vsub.s32 %v1194, %v1196
        %v1198 = vrot.slane %v1190, %v1197
        %v1200 = vunpack.c.l.s4 1934713408
        %v1201 = vunpack.c.0.s8 %v1200
        %v1202 = vlaneseq
        %v1203 = vshrl.u32 %v1202, 7
        %v1204 = vsub.s32 %v1201, %v1203
        %v1205 = vrot.slane %v1191, %v1204
        %v1206 = vcombine.high %v1182, 0.0
        %v1207 = vcombine.high %v1189, 0.0
        %v1208 = vcombine.high %v1198, 0.0
        %v1209 = vcombine.high %v1205, 0.0
        %v1210 = vcombine.low %v1182, %v1189
        %v1212 = vunpack.c.l.s4 1983009808
        %v1213 = vunpack.c.0.s8 %v1212
        %v1214 = vlaneseq
        %v1215 = vshrl.u32 %v1214, 7
        %v1216 = vsub.s32 %v1213, %v1215
        %v1217 = vrot.slane %v1210, %v1216
        %v1218 = vcombine.low %v1206, %v1207
        %v1220 = vunpack.c.l.s4 1983009808
        %v1221 = vunpack.c.0.s8 %v1220
        %v1222 = vlaneseq
        %v1223 = vshrl.u32 %v1222, 7
        %v1224 = vsub.s32 %v1221, %v1223
        %v1225 = vrot.slane %v1218, %v1224
        %v1226 = vcombine.low %v1198, %v1205
        %v1228 = vunpack.c.l.s4 1983009808
        %v1229 = vunpack.c.0.s8 %v1228
        %v1230 = vlaneseq
        %v1231 = vshrl.u32 %v1230, 7
        %v1232 = vsub.s32 %v1229, %v1231
        %v1233 = vrot.slane %v1226, %v1232
        %v1234 = vcombine.low %v1208, %v1209
        %v1236 = vunpack.c.l.s4 1983009808
        %v1237 = vunpack.c.0.s8 %v1236
        %v1238 = vlaneseq
        %v1239 = vshrl.u32 %v1238, 7
        %v1240 = vsub.s32 %v1237, %v1239
        %v1241 = vrot.slane %v1234, %v1240
        %v1242 = vcombine.low %v1217, %v1225
        %v1243 = vcombine.high %v1217, %v1225
        %v1245 = vunpack.c.l.s4 1934713408
        %v1246 = vunpack.c.0.s8 %v1245
        %v1247 = vlaneseq
        %v1248 = vshrl.u32 %v1247, 7
        %v1249 = vsub.s32 %v1246, %v1248
        %v1250 = vrot.slane %v1242, %v1249
        %v1252 = vunpack.c.l.s4 1934713408
        %v1253 = vunpack.c.0.s8 %v1252
        %v1254 = vlaneseq
        %v1255 = vshrl.u32 %v1254, 7
        %v1256 = vsub.s32 %v1253, %v1255
        %v1257 = vrot.slane %v1243, %v1256
        %v1258 = vcombine.low %v1233, %v1241
        %v1259 = vcombine.high %v1233, %v1241
        %v1261 = vunpack.c.l.s4 1934713408
        %v1262 = vunpack.c.0.s8 %v1261
        %v1263 = vlaneseq
        %v1264 = vshrl.u32 %v1263, 7
        %v1265 = vsub.s32 %v1262, %v1264
        %v1266 = vrot.slane %v1258, %v1265
        %v1268 = vunpack.c.l.s4 1934713408
        %v1269 = vunpack.c.0.s8 %v1268
        %v1270 = vlaneseq
        %v1271 = vshrl.u32 %v1270, 7
        %v1272 = vsub.s32 %v1269, %v1271
        %v1273 = vrot.slane %v1259, %v1272
        %v1274 = vcombine.low %v1250, %v1266
        %v1275 = vcombine.high %v1250, %v1266
        %v1276 = vcombine.low %v1257, %v1273
        %v1277 = vcombine.high %v1257, %v1273
        %v1278 = vld [vmem:[#allocation2] sm:$0xff]
        %v1279 = vld [vmem:[#allocation2 + $0x8] sm:$0xff]
        %v1280 = vld [vmem:[#allocation2 + $0x10] sm:$0xff]
        %v1281 = vld [vmem:[#allocation2 + $0x18] sm:$0xff]
        %vm1282 = vcmask 64512
        %v1284 = vsel %vm1282, %v1278, 0
        %v1287 = vsel %vm1282, %v1044, 0
        %1289 = vmatprep.subr.mxu0 0.0
        %1290 = vmatpush1.xpose.msra.mxu0 0.0
        %1291 = vmatprep.subr.mxu0 0.0
        %1292 = vmatpush1.xpose.msra.mxu0 0.0
        %1293 = vmatprep.subr.mxu0 0.0
        %1294 = vmatpush1.xpose.msra.mxu0 0.0
        %1295 = vmatprep.subr.mxu0 0.0
        %1296 = vmatpush1.xpose.msra.mxu0 0.0
        %1297 = vmatprep.subr.mxu0 0.0
        %1298 = vmatpush1.xpose.msra.mxu0 0.0
        %1299 = vmatprep.subr.mxu0 0.0
        %1300 = vmatpush1.xpose.msra.mxu0 0.0
        %1301 = vmatprep.subr.mxu0 0.0
        %1302 = vmatpush1.xpose.msra.mxu0 0.0
        %1303 = vmatprep.subr.mxu0 0.0
        %1304 = vmatpush1.xpose.msra.mxu0 0.0
        %1305 = vmatprep.subr.mxu0 0.0
        %1306 = vmatpush1.xpose.msra.mxu0 0.0
        %1307 = vmatprep.subr.mxu0 0.0
        %1308 = vmatpush1.xpose.msra.mxu0 0.0
        %1309 = vmatprep.subr.mxu0 0.0
        %1310 = vmatpush1.xpose.msra.mxu0 0.0
        %1311 = vmatprep.subr.mxu0 0.0
        %1312 = vmatpush1.xpose.msra.mxu0 0.0
        %1313 = vmatprep.subr.mxu0 0.0
        %1314 = vmatpush1.xpose.msra.mxu0 0.0
        %1315 = vmatprep.subr.mxu0 0.0
        %1316 = vmatpush1.xpose.msra.mxu0 0.0
        %1317 = vmatprep.subr.mxu0 0.0
        %1318 = vmatpush1.xpose.msra.mxu0 0.0
        %1319 = vmatprep.subr.mxu0 0.0
        %1320 = vmatpush1.xpose.msra.mxu0 %v1287
        %1321 = vmatprep.subr.mxu0 0.0
        %1322 = vmatpush2.xpose.msra.mxu0 0.0
        %1323 = vmatprep.subr.mxu0 0.0
        %1324 = vmatpush2.xpose.msra.mxu0 0.0
        %1325 = vmatprep.subr.mxu0 0.0
        %1326 = vmatpush2.xpose.msra.mxu0 0.0
        %1327 = vmatprep.subr.mxu0 0.0
        %1328 = vmatpush2.xpose.msra.mxu0 0.0
        %1329 = vmatprep.subr.mxu0 0.0
        %1330 = vmatpush2.xpose.msra.mxu0 0.0
        %1331 = vmatprep.subr.mxu0 0.0
        %1332 = vmatpush2.xpose.msra.mxu0 0.0
        %1333 = vmatprep.subr.mxu0 0.0
        %1334 = vmatpush2.xpose.msra.mxu0 0.0
        %1335 = vmatprep.subr.mxu0 0.0
        %1336 = vmatpush2.xpose.msra.mxu0 0.0
        %1337 = vmatprep.subr.mxu0 0.0
        %1338 = vmatpush2.xpose.msra.mxu0 0.0
        %1339 = vmatprep.subr.mxu0 0.0
        %1340 = vmatpush2.xpose.msra.mxu0 0.0
        %1341 = vmatprep.subr.mxu0 0.0
        %1342 = vmatpush2.xpose.msra.mxu0 0.0
        %1343 = vmatprep.subr.mxu0 0.0
        %1344 = vmatpush2.xpose.msra.mxu0 0.0
        %1345 = vmatprep.subr.mxu0 0.0
        %1346 = vmatpush2.xpose.msra.mxu0 0.0
        %1347 = vmatprep.subr.mxu0 0.0
        %1348 = vmatpush2.xpose.msra.mxu0 0.0
        %1349 = vmatprep.subr.mxu0 0.0
        %1350 = vmatpush2.xpose.msra.mxu0 0.0
        %1351 = vmatprep.subr.mxu0 0.0
        %1352 = vmatpush2.xpose.msra.mxu0 0.0
        %1353 = vmatprep.mubr.f32.mxu0 0.0
        %1354 = vmatmul.mubr.f32.gmra.mxu0 %v1284
        %v1355 = vpop.f32.mrf.mxu0
        %v1356 = vadd.f32 0.0, %v1355
        %v1357 = vpop.f32.mrf.mxu0
        %1358 = vdwg.mxu0
        %v1360 = vsel %vm1282, %v1279, 0
        %v1363 = vsel %vm1282, %v1045, 0
        %1365 = vmatprep.subr.mxu0 0.0
        %1366 = vmatpush1.xpose.msra.mxu0 0.0
        %1367 = vmatprep.subr.mxu0 0.0
        %1368 = vmatpush1.xpose.msra.mxu0 0.0
        %1369 = vmatprep.subr.mxu0 0.0
        %1370 = vmatpush1.xpose.msra.mxu0 0.0
        %1371 = vmatprep.subr.mxu0 0.0
        %1372 = vmatpush1.xpose.msra.mxu0 0.0
        %1373 = vmatprep.subr.mxu0 0.0
        %1374 = vmatpush1.xpose.msra.mxu0 0.0
        %1375 = vmatprep.subr.mxu0 0.0
        %1376 = vmatpush1.xpose.msra.mxu0 0.0
        %1377 = vmatprep.subr.mxu0 0.0
        %1378 = vmatpush1.xpose.msra.mxu0 0.0
        %1379 = vmatprep.subr.mxu0 0.0
        %1380 = vmatpush1.xpose.msra.mxu0 0.0
        %1381 = vmatprep.subr.mxu0 0.0
        %1382 = vmatpush1.xpose.msra.mxu0 0.0
        %1383 = vmatprep.subr.mxu0 0.0
        %1384 = vmatpush1.xpose.msra.mxu0 0.0
        %1385 = vmatprep.subr.mxu0 0.0
        %1386 = vmatpush1.xpose.msra.mxu0 0.0
        %1387 = vmatprep.subr.mxu0 0.0
        %1388 = vmatpush1.xpose.msra.mxu0 0.0
        %1389 = vmatprep.subr.mxu0 0.0
        %1390 = vmatpush1.xpose.msra.mxu0 0.0
        %1391 = vmatprep.subr.mxu0 0.0
        %1392 = vmatpush1.xpose.msra.mxu0 0.0
        %1393 = vmatprep.subr.mxu0 0.0
        %1394 = vmatpush1.xpose.msra.mxu0 0.0
        %1395 = vmatprep.subr.mxu0 0.0
        %1396 = vmatpush1.xpose.msra.mxu0 %v1363
        %1397 = vmatprep.subr.mxu0 0.0
        %1398 = vmatpush2.xpose.msra.mxu0 0.0
        %1399 = vmatprep.subr.mxu0 0.0
        %1400 = vmatpush2.xpose.msra.mxu0 0.0
        %1401 = vmatprep.subr.mxu0 0.0
        %1402 = vmatpush2.xpose.msra.mxu0 0.0
        %1403 = vmatprep.subr.mxu0 0.0
        %1404 = vmatpush2.xpose.msra.mxu0 0.0
        %1405 = vmatprep.subr.mxu0 0.0
        %1406 = vmatpush2.xpose.msra.mxu0 0.0
        %1407 = vmatprep.subr.mxu0 0.0
        %1408 = vmatpush2.xpose.msra.mxu0 0.0
        %1409 = vmatprep.subr.mxu0 0.0
        %1410 = vmatpush2.xpose.msra.mxu0 0.0
        %1411 = vmatprep.subr.mxu0 0.0
        %1412 = vmatpush2.xpose.msra.mxu0 0.0
        %1413 = vmatprep.subr.mxu0 0.0
        %1414 = vmatpush2.xpose.msra.mxu0 0.0
        %1415 = vmatprep.subr.mxu0 0.0
        %1416 = vmatpush2.xpose.msra.mxu0 0.0
        %1417 = vmatprep.subr.mxu0 0.0
        %1418 = vmatpush2.xpose.msra.mxu0 0.0
        %1419 = vmatprep.subr.mxu0 0.0
        %1420 = vmatpush2.xpose.msra.mxu0 0.0
        %1421 = vmatprep.subr.mxu0 0.0
        %1422 = vmatpush2.xpose.msra.mxu0 0.0
        %1423 = vmatprep.subr.mxu0 0.0
        %1424 = vmatpush2.xpose.msra.mxu0 0.0
        %1425 = vmatprep.subr.mxu0 0.0
        %1426 = vmatpush2.xpose.msra.mxu0 0.0
        %1427 = vmatprep.subr.mxu0 0.0
        %1428 = vmatpush2.xpose.msra.mxu0 0.0
        %1429 = vmatprep.mubr.f32.mxu0 0.0
        %1430 = vmatmul.mubr.f32.gmra.mxu0 %v1360
        %v1431 = vpop.f32.mrf.mxu0
        %v1432 = vadd.f32 0.0, %v1431
        %v1433 = vpop.f32.mrf.mxu0
        %1434 = vdwg.mxu0
        %v1436 = vsel %vm1282, %v1280, 0
        %v1439 = vsel %vm1282, %v1046, 0
        %1441 = vmatprep.subr.mxu0 0.0
        %1442 = vmatpush1.xpose.msra.mxu0 0.0
        %1443 = vmatprep.subr.mxu0 0.0
        %1444 = vmatpush1.xpose.msra.mxu0 0.0
        %1445 = vmatprep.subr.mxu0 0.0
        %1446 = vmatpush1.xpose.msra.mxu0 0.0
        %1447 = vmatprep.subr.mxu0 0.0
        %1448 = vmatpush1.xpose.msra.mxu0 0.0
        %1449 = vmatprep.subr.mxu0 0.0
        %1450 = vmatpush1.xpose.msra.mxu0 0.0
        %1451 = vmatprep.subr.mxu0 0.0
        %1452 = vmatpush1.xpose.msra.mxu0 0.0
        %1453 = vmatprep.subr.mxu0 0.0
        %1454 = vmatpush1.xpose.msra.mxu0 0.0
        %1455 = vmatprep.subr.mxu0 0.0
        %1456 = vmatpush1.xpose.msra.mxu0 0.0
        %1457 = vmatprep.subr.mxu0 0.0
        %1458 = vmatpush1.xpose.msra.mxu0 0.0
        %1459 = vmatprep.subr.mxu0 0.0
        %1460 = vmatpush1.xpose.msra.mxu0 0.0
        %1461 = vmatprep.subr.mxu0 0.0
        %1462 = vmatpush1.xpose.msra.mxu0 0.0
        %1463 = vmatprep.subr.mxu0 0.0
        %1464 = vmatpush1.xpose.msra.mxu0 0.0
        %1465 = vmatprep.subr.mxu0 0.0
        %1466 = vmatpush1.xpose.msra.mxu0 0.0
        %1467 = vmatprep.subr.mxu0 0.0
        %1468 = vmatpush1.xpose.msra.mxu0 0.0
        %1469 = vmatprep.subr.mxu0 0.0
        %1470 = vmatpush1.xpose.msra.mxu0 0.0
        %1471 = vmatprep.subr.mxu0 0.0
        %1472 = vmatpush1.xpose.msra.mxu0 %v1439
        %1473 = vmatprep.subr.mxu0 0.0
        %1474 = vmatpush2.xpose.msra.mxu0 0.0
        %1475 = vmatprep.subr.mxu0 0.0
        %1476 = vmatpush2.xpose.msra.mxu0 0.0
        %1477 = vmatprep.subr.mxu0 0.0
        %1478 = vmatpush2.xpose.msra.mxu0 0.0
        %1479 = vmatprep.subr.mxu0 0.0
        %1480 = vmatpush2.xpose.msra.mxu0 0.0
        %1481 = vmatprep.subr.mxu0 0.0
        %1482 = vmatpush2.xpose.msra.mxu0 0.0
        %1483 = vmatprep.subr.mxu0 0.0
        %1484 = vmatpush2.xpose.msra.mxu0 0.0
        %1485 = vmatprep.subr.mxu0 0.0
        %1486 = vmatpush2.xpose.msra.mxu0 0.0
        %1487 = vmatprep.subr.mxu0 0.0
        %1488 = vmatpush2.xpose.msra.mxu0 0.0
        %1489 = vmatprep.subr.mxu0 0.0
        %1490 = vmatpush2.xpose.msra.mxu0 0.0
        %1491 = vmatprep.subr.mxu0 0.0
        %1492 = vmatpush2.xpose.msra.mxu0 0.0
        %1493 = vmatprep.subr.mxu0 0.0
        %1494 = vmatpush2.xpose.msra.mxu0 0.0
        %1495 = vmatprep.subr.mxu0 0.0
        %1496 = vmatpush2.xpose.msra.mxu0 0.0
        %1497 = vmatprep.subr.mxu0 0.0
        %1498 = vmatpush2.xpose.msra.mxu0 0.0
        %1499 = vmatprep.subr.mxu0 0.0
        %1500 = vmatpush2.xpose.msra.mxu0 0.0
        %1501 = vmatprep.subr.mxu0 0.0
        %1502 = vmatpush2.xpose.msra.mxu0 0.0
        %1503 = vmatprep.subr.mxu0 0.0
        %1504 = vmatpush2.xpose.msra.mxu0 0.0
        %1505 = vmatprep.mubr.f32.mxu0 0.0
        %1506 = vmatmul.mubr.f32.gmra.mxu0 %v1436
        %v1507 = vpop.f32.mrf.mxu0
        %v1508 = vadd.f32 0.0, %v1507
        %v1509 = vpop.f32.mrf.mxu0
        %1510 = vdwg.mxu0
        %v1512 = vsel %vm1282, %v1281, 0
        %v1515 = vsel %vm1282, %v1047, 0
        %1517 = vmatprep.subr.mxu0 0.0
        %1518 = vmatpush1.xpose.msra.mxu0 0.0
        %1519 = vmatprep.subr.mxu0 0.0
        %1520 = vmatpush1.xpose.msra.mxu0 0.0
        %1521 = vmatprep.subr.mxu0 0.0
        %1522 = vmatpush1.xpose.msra.mxu0 0.0
        %1523 = vmatprep.subr.mxu0 0.0
        %1524 = vmatpush1.xpose.msra.mxu0 0.0
        %1525 = vmatprep.subr.mxu0 0.0
        %1526 = vmatpush1.xpose.msra.mxu0 0.0
        %1527 = vmatprep.subr.mxu0 0.0
        %1528 = vmatpush1.xpose.msra.mxu0 0.0
        %1529 = vmatprep.subr.mxu0 0.0
        %1530 = vmatpush1.xpose.msra.mxu0 0.0
        %1531 = vmatprep.subr.mxu0 0.0
        %1532 = vmatpush1.xpose.msra.mxu0 0.0
        %1533 = vmatprep.subr.mxu0 0.0
        %1534 = vmatpush1.xpose.msra.mxu0 0.0
        %1535 = vmatprep.subr.mxu0 0.0
        %1536 = vmatpush1.xpose.msra.mxu0 0.0
        %1537 = vmatprep.subr.mxu0 0.0
        %1538 = vmatpush1.xpose.msra.mxu0 0.0
        %1539 = vmatprep.subr.mxu0 0.0
        %1540 = vmatpush1.xpose.msra.mxu0 0.0
        %1541 = vmatprep.subr.mxu0 0.0
        %1542 = vmatpush1.xpose.msra.mxu0 0.0
        %1543 = vmatprep.subr.mxu0 0.0
        %1544 = vmatpush1.xpose.msra.mxu0 0.0
        %1545 = vmatprep.subr.mxu0 0.0
        %1546 = vmatpush1.xpose.msra.mxu0 0.0
        %1547 = vmatprep.subr.mxu0 0.0
        %1548 = vmatpush1.xpose.msra.mxu0 %v1515
        %1549 = vmatprep.subr.mxu0 0.0
        %1550 = vmatpush2.xpose.msra.mxu0 0.0
        %1551 = vmatprep.subr.mxu0 0.0
        %1552 = vmatpush2.xpose.msra.mxu0 0.0
        %1553 = vmatprep.subr.mxu0 0.0
        %1554 = vmatpush2.xpose.msra.mxu0 0.0
        %1555 = vmatprep.subr.mxu0 0.0
        %1556 = vmatpush2.xpose.msra.mxu0 0.0
        %1557 = vmatprep.subr.mxu0 0.0
        %1558 = vmatpush2.xpose.msra.mxu0 0.0
        %1559 = vmatprep.subr.mxu0 0.0
        %1560 = vmatpush2.xpose.msra.mxu0 0.0
        %1561 = vmatprep.subr.mxu0 0.0
        %1562 = vmatpush2.xpose.msra.mxu0 0.0
        %1563 = vmatprep.subr.mxu0 0.0
        %1564 = vmatpush2.xpose.msra.mxu0 0.0
        %1565 = vmatprep.subr.mxu0 0.0
        %1566 = vmatpush2.xpose.msra.mxu0 0.0
        %1567 = vmatprep.subr.mxu0 0.0
        %1568 = vmatpush2.xpose.msra.mxu0 0.0
        %1569 = vmatprep.subr.mxu0 0.0
        %1570 = vmatpush2.xpose.msra.mxu0 0.0
        %1571 = vmatprep.subr.mxu0 0.0
        %1572 = vmatpush2.xpose.msra.mxu0 0.0
        %1573 = vmatprep.subr.mxu0 0.0
        %1574 = vmatpush2.xpose.msra.mxu0 0.0
        %1575 = vmatprep.subr.mxu0 0.0
        %1576 = vmatpush2.xpose.msra.mxu0 0.0
        %1577 = vmatprep.subr.mxu0 0.0
        %1578 = vmatpush2.xpose.msra.mxu0 0.0
        %1579 = vmatprep.subr.mxu0 0.0
        %1580 = vmatpush2.xpose.msra.mxu0 0.0
        %1581 = vmatprep.mubr.f32.mxu0 0.0
        %1582 = vmatmul.mubr.f32.gmra.mxu0 %v1512
        %v1583 = vpop.f32.mrf.mxu0
        %v1584 = vadd.f32 0.0, %v1583
        %v1585 = vpop.f32.mrf.mxu0
        %1586 = vdwg.mxu0
        %v1587 = vld [vmem:[#allocation3] sm:$0xff]
        %v1588 = vld [vmem:[#allocation3 + $0x8] sm:$0xff]
        %v1589 = vld [vmem:[#allocation3 + $0x10] sm:$0xff]
        %v1590 = vld [vmem:[#allocation3 + $0x18] sm:$0xff]
        %v1591 = vsel %vm1282, %v1356, -inf
        %1592 = vmax.xlane.f32.xlu0 %v1591
        %v1593 = vpop.xlane.xlu0 %1592
        %v1594 = vsel %vm1282, %v1432, -inf
        %1595 = vmax.xlane.f32.xlu0 %v1594
        %v1596 = vpop.xlane.xlu0 %1595
        %v1597 = vsel %vm1282, %v1508, -inf
        %1598 = vmax.xlane.f32.xlu0 %v1597
        %v1599 = vpop.xlane.xlu0 %1598
        %v1600 = vsel %vm1282, %v1584, -inf
        %1601 = vmax.xlane.f32.xlu0 %v1600
        %v1602 = vpop.xlane.xlu0 %1601
        %v1603 = vmax.f32 %v1587, %v1593
        %v1604 = vmax.f32 %v1588, %v1596
        %v1605 = vmax.f32 %v1589, %v1599
        %v1606 = vmax.f32 %v1590, %v1602
        %v1607 = vsub.f32 %v1587, %v1603
        %v1608 = vsub.f32 %v1588, %v1604
        %v1609 = vsub.f32 %v1589, %v1605
        %v1610 = vsub.f32 %v1590, %v1606
        %v1611 = vmul.f32 %v1607, 1.442695
        %v1612 = vpow.pop %v1611
        %v1613 = vmul.f32 %v1608, 1.442695
        %v1614 = vpow.pop %v1613
        %v1615 = vmul.f32 %v1609, 1.442695
        %v1616 = vpow.pop %v1615
        %v1617 = vmul.f32 %v1610, 1.442695
        %v1618 = vpow.pop %v1617
        %1620 = vset.pattern.permute.xlu0 0
        %1621 = vperm.xlu0 %1620, %v1603
        %v1622 = vpop.permute.xlu0 %1621
        %1625 = vset.pattern.permute.xlu0 0
        %1626 = vperm.xlu0 %1625, %v1604
        %v1627 = vpop.permute.xlu0 %1626
        %1630 = vset.pattern.permute.xlu0 0
        %1631 = vperm.xlu0 %1630, %v1605
        %v1632 = vpop.permute.xlu0 %1631
        %1635 = vset.pattern.permute.xlu0 0
        %1636 = vperm.xlu0 %1635, %v1606
        %v1637 = vpop.permute.xlu0 %1636
        %v1639 = vsub.f32 %v1356, %v1622
        %v1640 = vsub.f32 %v1432, %v1627
        %v1641 = vsub.f32 %v1508, %v1632
        %v1642 = vsub.f32 %v1584, %v1637
        %v1643 = vmul.f32 %v1639, 1.442695
        %v1644 = vpow.pop %v1643
        %v1645 = vmul.f32 %v1640, 1.442695
        %v1646 = vpow.pop %v1645
        %v1647 = vmul.f32 %v1641, 1.442695
        %v1648 = vpow.pop %v1647
        %v1649 = vmul.f32 %v1642, 1.442695
        %v1650 = vpow.pop %v1649
        %v1651 = vld [vmem:[#allocation4] sm:$0xff]
        %v1652 = vld [vmem:[#allocation4 + $0x8] sm:$0xff]
        %v1653 = vld [vmem:[#allocation4 + $0x10] sm:$0xff]
        %v1654 = vld [vmem:[#allocation4 + $0x18] sm:$0xff]
        %v1655 = vmul.f32 %v1612, %v1651
        %v1656 = vmul.f32 %v1614, %v1652
        %v1657 = vmul.f32 %v1616, %v1653
        %v1658 = vmul.f32 %v1618, %v1654
        %v1659 = vsel %vm1282, %v1644, 0.0
        %1660 = vadd.xlane.f32.xlu0 %v1659
        %v1661 = vpop.xlane.xlu0 %1660
        %v1662 = vsel %vm1282, %v1646, 0.0
        %1663 = vadd.xlane.f32.xlu0 %v1662
        %v1664 = vpop.xlane.xlu0 %1663
        %v1665 = vsel %vm1282, %v1648, 0.0
        %1666 = vadd.xlane.f32.xlu0 %v1665
        %v1667 = vpop.xlane.xlu0 %1666
        %v1668 = vsel %vm1282, %v1650, 0.0
        %1669 = vadd.xlane.f32.xlu0 %v1668
        %v1670 = vpop.xlane.xlu0 %1669
        %v1671 = vadd.f32 %v1655, %v1661
        %v1672 = vadd.f32 %v1656, %v1664
        %v1673 = vadd.f32 %v1657, %v1667
        %v1674 = vadd.f32 %v1658, %v1670
        %vm1675 = vcmask 7168
        %1676 = vst.msk [vmem:[#allocation4] sm:$0xff] %vm1675, %v1671
        %1677 = vst.msk [vmem:[#allocation4 + $0x8] sm:$0xff] %vm1675, %v1672
        %1678 = vst.msk [vmem:[#allocation4 + $0x10] sm:$0xff] %vm1675, %v1673
        %1679 = vst.msk [vmem:[#allocation4 + $0x18] sm:$0xff] %vm1675, %v1674
        %v1680 = vld [vmem:[#allocation5] sm:$0xff]
        %v1681 = vld [vmem:[#allocation5 + $0x8] sm:$0xff]
        %v1682 = vld [vmem:[#allocation5 + $0x10] sm:$0xff]
        %v1683 = vld [vmem:[#allocation5 + $0x18] sm:$0xff]
        %1685 = vset.pattern.permute.xlu0 0
        %1686 = vperm.xlu0 %1685, %v1612
        %v1687 = vpop.permute.xlu0 %1686
        %1690 = vset.pattern.permute.xlu0 0
        %1691 = vperm.xlu0 %1690, %v1614
        %v1692 = vpop.permute.xlu0 %1691
        %1695 = vset.pattern.permute.xlu0 0
        %1696 = vperm.xlu0 %1695, %v1616
        %v1697 = vpop.permute.xlu0 %1696
        %1700 = vset.pattern.permute.xlu0 0
        %1701 = vperm.xlu0 %1700, %v1618
        %v1702 = vpop.permute.xlu0 %1701
        %v1704 = vmul.f32 %v1687, %v1680
        %v1705 = vmul.f32 %v1692, %v1681
        %v1706 = vmul.f32 %v1697, %v1682
        %v1707 = vmul.f32 %v1702, %v1683
        %v1709 = vsel %vm1282, %v1644, 0
        %1711 = vmatprep.subr.mxu0 0.0
        %1712 = vmatpush1.msra.mxu0 0.0
        %1713 = vmatprep.subr.mxu0 0.0
        %1714 = vmatpush1.msra.mxu0 0.0
        %1715 = vmatprep.subr.mxu0 0.0
        %1716 = vmatpush1.msra.mxu0 0.0
        %1717 = vmatprep.subr.mxu0 0.0
        %1718 = vmatpush1.msra.mxu0 0.0
        %1719 = vmatprep.subr.mxu0 0.0
        %1720 = vmatpush1.msra.mxu0 0.0
        %1721 = vmatprep.subr.mxu0 0.0
        %1722 = vmatpush1.msra.mxu0 0.0
        %1723 = vmatprep.subr.mxu0 0.0
        %1724 = vmatpush1.msra.mxu0 0.0
        %1725 = vmatprep.subr.mxu0 0.0
        %1726 = vmatpush1.msra.mxu0 0.0
        %1727 = vmatprep.subr.mxu0 0.0
        %1728 = vmatpush1.msra.mxu0 0.0
        %1729 = vmatprep.subr.mxu0 0.0
        %1730 = vmatpush1.msra.mxu0 0.0
        %1731 = vmatprep.subr.mxu0 0.0
        %1732 = vmatpush1.msra.mxu0 0.0
        %1733 = vmatprep.subr.mxu0 0.0
        %1734 = vmatpush1.msra.mxu0 0.0
        %1735 = vmatprep.subr.mxu0 0.0
        %1736 = vmatpush1.msra.mxu0 0.0
        %1737 = vmatprep.subr.mxu0 0.0
        %1738 = vmatpush1.msra.mxu0 0.0
        %1739 = vmatprep.subr.mxu0 0.0
        %1740 = vmatpush1.msra.mxu0 0.0
        %1741 = vmatprep.subr.mxu0 0.0
        %1742 = vmatpush1.msra.mxu0 %v1274
        %1743 = vmatprep.subr.mxu0 0.0
        %1744 = vmatpush2.msra.mxu0 0.0
        %1745 = vmatprep.subr.mxu0 0.0
        %1746 = vmatpush2.msra.mxu0 0.0
        %1747 = vmatprep.subr.mxu0 0.0
        %1748 = vmatpush2.msra.mxu0 0.0
        %1749 = vmatprep.subr.mxu0 0.0
        %1750 = vmatpush2.msra.mxu0 0.0
        %1751 = vmatprep.subr.mxu0 0.0
        %1752 = vmatpush2.msra.mxu0 0.0
        %1753 = vmatprep.subr.mxu0 0.0
        %1754 = vmatpush2.msra.mxu0 0.0
        %1755 = vmatprep.subr.mxu0 0.0
        %1756 = vmatpush2.msra.mxu0 0.0
        %1757 = vmatprep.subr.mxu0 0.0
        %1758 = vmatpush2.msra.mxu0 0.0
        %1759 = vmatprep.subr.mxu0 0.0
        %1760 = vmatpush2.msra.mxu0 0.0
        %1761 = vmatprep.subr.mxu0 0.0
        %1762 = vmatpush2.msra.mxu0 0.0
        %1763 = vmatprep.subr.mxu0 0.0
        %1764 = vmatpush2.msra.mxu0 0.0
        %1765 = vmatprep.subr.mxu0 0.0
        %1766 = vmatpush2.msra.mxu0 0.0
        %1767 = vmatprep.subr.mxu0 0.0
        %1768 = vmatpush2.msra.mxu0 0.0
        %1769 = vmatprep.subr.mxu0 0.0
        %1770 = vmatpush2.msra.mxu0 0.0
        %1771 = vmatprep.subr.mxu0 0.0
        %1772 = vmatpush2.msra.mxu0 0.0
        %1773 = vmatprep.subr.mxu0 0.0
        %1774 = vmatpush2.msra.mxu0 0.0
        %1775 = vmatprep.mubr.f32.mxu0 0.0
        %1776 = vmatmul.mubr.f32.gmra.mxu0 %v1709
        %v1777 = vpop.f32.mrf.mxu0
        %v1778 = vadd.f32 0.0, %v1777
        %v1779 = vpop.f32.mrf.mxu0
        %1780 = vdwg.mxu0
        %v1782 = vsel %vm1282, %v1646, 0
        %1784 = vmatprep.subr.mxu0 0.0
        %1785 = vmatpush1.msra.mxu0 0.0
        %1786 = vmatprep.subr.mxu0 0.0
        %1787 = vmatpush1.msra.mxu0 0.0
        %1788 = vmatprep.subr.mxu0 0.0
        %1789 = vmatpush1.msra.mxu0 0.0
        %1790 = vmatprep.subr.mxu0 0.0
        %1791 = vmatpush1.msra.mxu0 0.0
        %1792 = vmatprep.subr.mxu0 0.0
        %1793 = vmatpush1.msra.mxu0 0.0
        %1794 = vmatprep.subr.mxu0 0.0
        %1795 = vmatpush1.msra.mxu0 0.0
        %1796 = vmatprep.subr.mxu0 0.0
        %1797 = vmatpush1.msra.mxu0 0.0
        %1798 = vmatprep.subr.mxu0 0.0
        %1799 = vmatpush1.msra.mxu0 0.0
        %1800 = vmatprep.subr.mxu0 0.0
        %1801 = vmatpush1.msra.mxu0 0.0
        %1802 = vmatprep.subr.mxu0 0.0
        %1803 = vmatpush1.msra.mxu0 0.0
        %1804 = vmatprep.subr.mxu0 0.0
        %1805 = vmatpush1.msra.mxu0 0.0
        %1806 = vmatprep.subr.mxu0 0.0
        %1807 = vmatpush1.msra.mxu0 0.0
        %1808 = vmatprep.subr.mxu0 0.0
        %1809 = vmatpush1.msra.mxu0 0.0
        %1810 = vmatprep.subr.mxu0 0.0
        %1811 = vmatpush1.msra.mxu0 0.0
        %1812 = vmatprep.subr.mxu0 0.0
        %1813 = vmatpush1.msra.mxu0 0.0
        %1814 = vmatprep.subr.mxu0 0.0
        %1815 = vmatpush1.msra.mxu0 %v1275
        %1816 = vmatprep.subr.mxu0 0.0
        %1817 = vmatpush2.msra.mxu0 0.0
        %1818 = vmatprep.subr.mxu0 0.0
        %1819 = vmatpush2.msra.mxu0 0.0
        %1820 = vmatprep.subr.mxu0 0.0
        %1821 = vmatpush2.msra.mxu0 0.0
        %1822 = vmatprep.subr.mxu0 0.0
        %1823 = vmatpush2.msra.mxu0 0.0
        %1824 = vmatprep.subr.mxu0 0.0
        %1825 = vmatpush2.msra.mxu0 0.0
        %1826 = vmatprep.subr.mxu0 0.0
        %1827 = vmatpush2.msra.mxu0 0.0
        %1828 = vmatprep.subr.mxu0 0.0
        %1829 = vmatpush2.msra.mxu0 0.0
        %1830 = vmatprep.subr.mxu0 0.0
        %1831 = vmatpush2.msra.mxu0 0.0
        %1832 = vmatprep.subr.mxu0 0.0
        %1833 = vmatpush2.msra.mxu0 0.0
        %1834 = vmatprep.subr.mxu0 0.0
        %1835 = vmatpush2.msra.mxu0 0.0
        %1836 = vmatprep.subr.mxu0 0.0
        %1837 = vmatpush2.msra.mxu0 0.0
        %1838 = vmatprep.subr.mxu0 0.0
        %1839 = vmatpush2.msra.mxu0 0.0
        %1840 = vmatprep.subr.mxu0 0.0
        %1841 = vmatpush2.msra.mxu0 0.0
        %1842 = vmatprep.subr.mxu0 0.0
        %1843 = vmatpush2.msra.mxu0 0.0
        %1844 = vmatprep.subr.mxu0 0.0
        %1845 = vmatpush2.msra.mxu0 0.0
        %1846 = vmatprep.subr.mxu0 0.0
        %1847 = vmatpush2.msra.mxu0 0.0
        %1848 = vmatprep.mubr.f32.mxu0 0.0
        %1849 = vmatmul.mubr.f32.gmra.mxu0 %v1782
        %v1850 = vpop.f32.mrf.mxu0
        %v1851 = vadd.f32 0.0, %v1850
        %v1852 = vpop.f32.mrf.mxu0
        %1853 = vdwg.mxu0
        %v1855 = vsel %vm1282, %v1648, 0
        %1857 = vmatprep.subr.mxu0 0.0
        %1858 = vmatpush1.msra.mxu0 0.0
        %1859 = vmatprep.subr.mxu0 0.0
        %1860 = vmatpush1.msra.mxu0 0.0
        %1861 = vmatprep.subr.mxu0 0.0
        %1862 = vmatpush1.msra.mxu0 0.0
        %1863 = vmatprep.subr.mxu0 0.0
        %1864 = vmatpush1.msra.mxu0 0.0
        %1865 = vmatprep.subr.mxu0 0.0
        %1866 = vmatpush1.msra.mxu0 0.0
        %1867 = vmatprep.subr.mxu0 0.0
        %1868 = vmatpush1.msra.mxu0 0.0
        %1869 = vmatprep.subr.mxu0 0.0
        %1870 = vmatpush1.msra.mxu0 0.0
        %1871 = vmatprep.subr.mxu0 0.0
        %1872 = vmatpush1.msra.mxu0 0.0
        %1873 = vmatprep.subr.mxu0 0.0
        %1874 = vmatpush1.msra.mxu0 0.0
        %1875 = vmatprep.subr.mxu0 0.0
        %1876 = vmatpush1.msra.mxu0 0.0
        %1877 = vmatprep.subr.mxu0 0.0
        %1878 = vmatpush1.msra.mxu0 0.0
        %1879 = vmatprep.subr.mxu0 0.0
        %1880 = vmatpush1.msra.mxu0 0.0
        %1881 = vmatprep.subr.mxu0 0.0
        %1882 = vmatpush1.msra.mxu0 0.0
        %1883 = vmatprep.subr.mxu0 0.0
        %1884 = vmatpush1.msra.mxu0 0.0
        %1885 = vmatprep.subr.mxu0 0.0
        %1886 = vmatpush1.msra.mxu0 0.0
        %1887 = vmatprep.subr.mxu0 0.0
        %1888 = vmatpush1.msra.mxu0 %v1276
        %1889 = vmatprep.subr.mxu0 0.0
        %1890 = vmatpush2.msra.mxu0 0.0
        %1891 = vmatprep.subr.mxu0 0.0
        %1892 = vmatpush2.msra.mxu0 0.0
        %1893 = vmatprep.subr.mxu0 0.0
        %1894 = vmatpush2.msra.mxu0 0.0
        %1895 = vmatprep.subr.mxu0 0.0
        %1896 = vmatpush2.msra.mxu0 0.0
        %1897 = vmatprep.subr.mxu0 0.0
        %1898 = vmatpush2.msra.mxu0 0.0
        %1899 = vmatprep.subr.mxu0 0.0
        %1900 = vmatpush2.msra.mxu0 0.0
        %1901 = vmatprep.subr.mxu0 0.0
        %1902 = vmatpush2.msra.mxu0 0.0
        %1903 = vmatprep.subr.mxu0 0.0
        %1904 = vmatpush2.msra.mxu0 0.0
        %1905 = vmatprep.subr.mxu0 0.0
        %1906 = vmatpush2.msra.mxu0 0.0
        %1907 = vmatprep.subr.mxu0 0.0
        %1908 = vmatpush2.msra.mxu0 0.0
        %1909 = vmatprep.subr.mxu0 0.0
        %1910 = vmatpush2.msra.mxu0 0.0
        %1911 = vmatprep.subr.mxu0 0.0
        %1912 = vmatpush2.msra.mxu0 0.0
        %1913 = vmatprep.subr.mxu0 0.0
        %1914 = vmatpush2.msra.mxu0 0.0
        %1915 = vmatprep.subr.mxu0 0.0
        %1916 = vmatpush2.msra.mxu0 0.0
        %1917 = vmatprep.subr.mxu0 0.0
        %1918 = vmatpush2.msra.mxu0 0.0
        %1919 = vmatprep.subr.mxu0 0.0
        %1920 = vmatpush2.msra.mxu0 0.0
        %1921 = vmatprep.mubr.f32.mxu0 0.0
        %1922 = vmatmul.mubr.f32.gmra.mxu0 %v1855
        %v1923 = vpop.f32.mrf.mxu0
        %v1924 = vadd.f32 0.0, %v1923
        %v1925 = vpop.f32.mrf.mxu0
        %1926 = vdwg.mxu0
        %v1928 = vsel %vm1282, %v1650, 0
        %1930 = vmatprep.subr.mxu0 0.0
        %1931 = vmatpush1.msra.mxu0 0.0
        %1932 = vmatprep.subr.mxu0 0.0
        %1933 = vmatpush1.msra.mxu0 0.0
        %1934 = vmatprep.subr.mxu0 0.0
        %1935 = vmatpush1.msra.mxu0 0.0
        %1936 = vmatprep.subr.mxu0 0.0
        %1937 = vmatpush1.msra.mxu0 0.0
        %1938 = vmatprep.subr.mxu0 0.0
        %1939 = vmatpush1.msra.mxu0 0.0
        %1940 = vmatprep.subr.mxu0 0.0
        %1941 = vmatpush1.msra.mxu0 0.0
        %1942 = vmatprep.subr.mxu0 0.0
        %1943 = vmatpush1.msra.mxu0 0.0
        %1944 = vmatprep.subr.mxu0 0.0
        %1945 = vmatpush1.msra.mxu0 0.0
        %1946 = vmatprep.subr.mxu0 0.0
        %1947 = vmatpush1.msra.mxu0 0.0
        %1948 = vmatprep.subr.mxu0 0.0
        %1949 = vmatpush1.msra.mxu0 0.0
        %1950 = vmatprep.subr.mxu0 0.0
        %1951 = vmatpush1.msra.mxu0 0.0
        %1952 = vmatprep.subr.mxu0 0.0
        %1953 = vmatpush1.msra.mxu0 0.0
        %1954 = vmatprep.subr.mxu0 0.0
        %1955 = vmatpush1.msra.mxu0 0.0
        %1956 = vmatprep.subr.mxu0 0.0
        %1957 = vmatpush1.msra.mxu0 0.0
        %1958 = vmatprep.subr.mxu0 0.0
        %1959 = vmatpush1.msra.mxu0 0.0
        %1960 = vmatprep.subr.mxu0 0.0
        %1961 = vmatpush1.msra.mxu0 %v1277
        %1962 = vmatprep.subr.mxu0 0.0
        %1963 = vmatpush2.msra.mxu0 0.0
        %1964 = vmatprep.subr.mxu0 0.0
        %1965 = vmatpush2.msra.mxu0 0.0
        %1966 = vmatprep.subr.mxu0 0.0
        %1967 = vmatpush2.msra.mxu0 0.0
        %1968 = vmatprep.subr.mxu0 0.0
        %1969 = vmatpush2.msra.mxu0 0.0
        %1970 = vmatprep.subr.mxu0 0.0
        %1971 = vmatpush2.msra.mxu0 0.0
        %1972 = vmatprep.subr.mxu0 0.0
        %1973 = vmatpush2.msra.mxu0 0.0
        %1974 = vmatprep.subr.mxu0 0.0
        %1975 = vmatpush2.msra.mxu0 0.0
        %1976 = vmatprep.subr.mxu0 0.0
        %1977 = vmatpush2.msra.mxu0 0.0
        %1978 = vmatprep.subr.mxu0 0.0
        %1979 = vmatpush2.msra.mxu0 0.0
        %1980 = vmatprep.subr.mxu0 0.0
        %1981 = vmatpush2.msra.mxu0 0.0
        %1982 = vmatprep.subr.mxu0 0.0
        %1983 = vmatpush2.msra.mxu0 0.0
        %1984 = vmatprep.subr.mxu0 0.0
        %1985 = vmatpush2.msra.mxu0 0.0
        %1986 = vmatprep.subr.mxu0 0.0
        %1987 = vmatpush2.msra.mxu0 0.0
        %1988 = vmatprep.subr.mxu0 0.0
        %1989 = vmatpush2.msra.mxu0 0.0
        %1990 = vmatprep.subr.mxu0 0.0
        %1991 = vmatpush2.msra.mxu0 0.0
        %1992 = vmatprep.subr.mxu0 0.0
        %1993 = vmatpush2.msra.mxu0 0.0
        %1994 = vmatprep.mubr.f32.mxu0 0.0
        %1995 = vmatmul.mubr.f32.gmra.mxu0 %v1928
        %v1996 = vpop.f32.mrf.mxu0
        %v1997 = vadd.f32 0.0, %v1996
        %v1998 = vpop.f32.mrf.mxu0
        %1999 = vdwg.mxu0
        %v2000 = vadd.f32 %v1704, %v1778
        %v2001 = vadd.f32 %v1705, %v1851
        %v2002 = vadd.f32 %v1706, %v1924
        %v2003 = vadd.f32 %v1707, %v1997
        %2004 = vst.msk [vmem:[#allocation5] sm:$0xff] %vm1282, %v2000
        %2005 = vst.msk [vmem:[#allocation5 + $0x8] sm:$0xff] %vm1282, %v2001
        %2006 = vst.msk [vmem:[#allocation5 + $0x10] sm:$0xff] %vm1282, %v2002
        %2007 = vst.msk [vmem:[#allocation5 + $0x18] sm:$0xff] %vm1282, %v2003
        %2008 = vst.msk [vmem:[#allocation3] sm:$0xff] %vm1675, %v1603
        %2009 = vst.msk [vmem:[#allocation3 + $0x8] sm:$0xff] %vm1675, %v1604
        %2010 = vst.msk [vmem:[#allocation3 + $0x10] sm:$0xff] %vm1675, %v1605
        %2011 = vst.msk [vmem:[#allocation3 + $0x18] sm:$0xff] %vm1675, %v1606
        // Predicated region
        $region97: #{tpu_custom_call.1} parent=63 // pred_check
          %p2012 = pneg %p561
        $region98: #{tpu_custom_call.1} parent=63 // pred_check_branch
          %2014 = sbr.rel (%p2012) target = $region100
        $region99: #{tpu_custom_call.1} parent=63 // pred_region
          %v2015 = vld [vmem:[#allocation5] sm:$0xff]
          %v2016 = vld [vmem:[#allocation5 + $0x8] sm:$0xff]
          %v2017 = vld [vmem:[#allocation5 + $0x10] sm:$0xff]
          %v2018 = vld [vmem:[#allocation5 + $0x18] sm:$0xff]
          %v2019 = vld [vmem:[#allocation4] sm:$0xff]
          %v2020 = vld [vmem:[#allocation4 + $0x8] sm:$0xff]
          %v2021 = vld [vmem:[#allocation4 + $0x10] sm:$0xff]
          %v2022 = vld [vmem:[#allocation4 + $0x18] sm:$0xff]
          %v2023 = vrcp.pop %v2019
          %v2024 = vrcp.pop %v2020
          %v2025 = vrcp.pop %v2021
          %v2026 = vrcp.pop %v2022
          %2028 = vset.pattern.permute.xlu0 0
          %2029 = vperm.xlu0 %2028, %v2023
          %v2030 = vpop.permute.xlu0 %2029
          %2033 = vset.pattern.permute.xlu0 0
          %2034 = vperm.xlu0 %2033, %v2024
          %v2035 = vpop.permute.xlu0 %2034
          %2038 = vset.pattern.permute.xlu0 0
          %2039 = vperm.xlu0 %2038, %v2025
          %v2040 = vpop.permute.xlu0 %2039
          %2043 = vset.pattern.permute.xlu0 0
          %2044 = vperm.xlu0 %2043, %v2026
          %v2045 = vpop.permute.xlu0 %2044
          %v2047 = vmul.f32 %v2015, %v2030
          %v2048 = vmul.f32 %v2016, %v2035
          %v2049 = vmul.f32 %v2017, %v2040
          %v2050 = vmul.f32 %v2018, %v2045
          %v2051 = vcombine.low %v2047, %v2049
          %v2052 = vcombine.high %v2047, %v2049
          %v2054 = vunpack.c.l.s4 1983009808
          %v2055 = vunpack.c.0.s8 %v2054
          %v2056 = vlaneseq
          %v2057 = vshrl.u32 %v2056, 7
          %v2058 = vsub.s32 %v2055, %v2057
          %v2059 = vrot.slane %v2051, %v2058
          %v2061 = vunpack.c.l.s4 1983009808
          %v2062 = vunpack.c.0.s8 %v2061
          %v2063 = vlaneseq
          %v2064 = vshrl.u32 %v2063, 7
          %v2065 = vsub.s32 %v2062, %v2064
          %v2066 = vrot.slane %v2052, %v2065
          %v2067 = vcombine.low %v2048, %v2050
          %v2068 = vcombine.high %v2048, %v2050
          %v2070 = vunpack.c.l.s4 1983009808
          %v2071 = vunpack.c.0.s8 %v2070
          %v2072 = vlaneseq
          %v2073 = vshrl.u32 %v2072, 7
          %v2074 = vsub.s32 %v2071, %v2073
          %v2075 = vrot.slane %v2067, %v2074
          %v2077 = vunpack.c.l.s4 1983009808
          %v2078 = vunpack.c.0.s8 %v2077
          %v2079 = vlaneseq
          %v2080 = vshrl.u32 %v2079, 7
          %v2081 = vsub.s32 %v2078, %v2080
          %v2082 = vrot.slane %v2068, %v2081
          %v2083 = vcombine.low %v2059, %v2075
          %v2084 = vcombine.high %v2059, %v2075
          %v2086 = vunpack.c.l.s4 1934713408
          %v2087 = vunpack.c.0.s8 %v2086
          %v2088 = vlaneseq
          %v2089 = vshrl.u32 %v2088, 7
          %v2090 = vsub.s32 %v2087, %v2089
          %v2091 = vrot.slane %v2083, %v2090
          %v2093 = vunpack.c.l.s4 1934713408
          %v2094 = vunpack.c.0.s8 %v2093
          %v2095 = vlaneseq
          %v2096 = vshrl.u32 %v2095, 7
          %v2097 = vsub.s32 %v2094, %v2096
          %v2098 = vrot.slane %v2084, %v2097
          %v2099 = vcombine.low %v2066, %v2082
          %v2100 = vcombine.high %v2066, %v2082
          %v2102 = vunpack.c.l.s4 1934713408
          %v2103 = vunpack.c.0.s8 %v2102
          %v2104 = vlaneseq
          %v2105 = vshrl.u32 %v2104, 7
          %v2106 = vsub.s32 %v2103, %v2105
          %v2107 = vrot.slane %v2099, %v2106
          %v2109 = vunpack.c.l.s4 1934713408
          %v2110 = vunpack.c.0.s8 %v2109
          %v2111 = vlaneseq
          %v2112 = vshrl.u32 %v2111, 7
          %v2113 = vsub.s32 %v2110, %v2112
          %v2114 = vrot.slane %v2100, %v2113
          %v2115 = vcombine.high %v2091, 0.0
          %v2116 = vcombine.high %v2098, 0.0
          %v2117 = vcombine.high %v2107, 0.0
          %v2118 = vcombine.high %v2114, 0.0
          %v2119 = vcombine.low %v2091, %v2098
          %v2121 = vunpack.c.l.s4 1983009808
          %v2122 = vunpack.c.0.s8 %v2121
          %v2123 = vlaneseq
          %v2124 = vshrl.u32 %v2123, 7
          %v2125 = vsub.s32 %v2122, %v2124
          %v2126 = vrot.slane %v2119, %v2125
          %v2127 = vcombine.low %v2115, %v2116
          %v2129 = vunpack.c.l.s4 1983009808
          %v2130 = vunpack.c.0.s8 %v2129
          %v2131 = vlaneseq
          %v2132 = vshrl.u32 %v2131, 7
          %v2133 = vsub.s32 %v2130, %v2132
          %v2134 = vrot.slane %v2127, %v2133
          %v2135 = vcombine.low %v2107, %v2114
          %v2137 = vunpack.c.l.s4 1983009808
          %v2138 = vunpack.c.0.s8 %v2137
          %v2139 = vlaneseq
          %v2140 = vshrl.u32 %v2139, 7
          %v2141 = vsub.s32 %v2138, %v2140
          %v2142 = vrot.slane %v2135, %v2141
          %v2143 = vcombine.low %v2117, %v2118
          %v2145 = vunpack.c.l.s4 1983009808
          %v2146 = vunpack.c.0.s8 %v2145
          %v2147 = vlaneseq
          %v2148 = vshrl.u32 %v2147, 7
          %v2149 = vsub.s32 %v2146, %v2148
          %v2150 = vrot.slane %v2143, %v2149
          %v2151 = vcombine.low %v2126, %v2134
          %v2152 = vcombine.high %v2126, %v2134
          %v2154 = vunpack.c.l.s4 1934713408
          %v2155 = vunpack.c.0.s8 %v2154
          %v2156 = vlaneseq
          %v2157 = vshrl.u32 %v2156, 7
          %v2158 = vsub.s32 %v2155, %v2157
          %v2159 = vrot.slane %v2151, %v2158
          %v2161 = vunpack.c.l.s4 1934713408
          %v2162 = vunpack.c.0.s8 %v2161
          %v2163 = vlaneseq
          %v2164 = vshrl.u32 %v2163, 7
          %v2165 = vsub.s32 %v2162, %v2164
          %v2166 = vrot.slane %v2152, %v2165
          %v2167 = vcombine.low %v2142, %v2150
          %v2168 = vcombine.high %v2142, %v2150
          %v2170 = vunpack.c.l.s4 1934713408
          %v2171 = vunpack.c.0.s8 %v2170
          %v2172 = vlaneseq
          %v2173 = vshrl.u32 %v2172, 7
          %v2174 = vsub.s32 %v2171, %v2173
          %v2175 = vrot.slane %v2167, %v2174
          %v2177 = vunpack.c.l.s4 1934713408
          %v2178 = vunpack.c.0.s8 %v2177
          %v2179 = vlaneseq
          %v2180 = vshrl.u32 %v2179, 7
          %v2181 = vsub.s32 %v2178, %v2180
          %v2182 = vrot.slane %v2168, %v2181
          %v2183 = vcombine.low %v2159, %v2175
          %v2184 = vcombine.high %v2159, %v2175
          %v2185 = vcombine.low %v2166, %v2182
          %v2186 = vcombine.high %v2166, %v2182
          %2188 = vrot.lane.b32.xlu0 %v2184, 8
          %v2189 = vpop.permute.xlu0 %2188
          %2192 = vrot.lane.b32.xlu0 %v2185, 16
          %v2193 = vpop.permute.xlu0 %2192
          %2196 = vrot.lane.b32.xlu0 %v2186, 24
          %v2197 = vpop.permute.xlu0 %2196
          %v2199 = vsel %vm1282, %v2183, %v2189
          %vm2200 = vcmask 130048
          %v2201 = vsel %vm2200, %v2199, %v2193
          %vm2202 = vcmask 195584
          %v2203 = vsel %vm2202, %v2201, %v2197
          %v2204 = vld [vmem:[#allocation17] sm:$0xff]
          %v2205 = vld [vmem:[#allocation17 + $0x8] sm:$0xff]
          %v2206 = vld [vmem:[#allocation17 + $0x10] sm:$0xff]
          %v2207 = vld [vmem:[#allocation17 + $0x18] sm:$0xff]
          %v2208 = vld [vmem:[%s10] sm:$0x1]
          %v2210 = vlaneseq
          %v2211 = vshrl.u32 %v2210, 7
          %v2212 = vsub.s32 0, %v2211
          %v2213 = vrot.slane %v2208, %v2212
          %v2216 = vsel %vm828, %v2203, 0
          %2218 = vmatprep.subr.mxu0 0.0
          %2219 = vmatpush1.msra.mxu0 0.0
          %2220 = vmatprep.subr.mxu0 0.0
          %2221 = vmatpush1.msra.mxu0 0.0
          %2222 = vmatprep.subr.mxu0 0.0
          %2223 = vmatpush1.msra.mxu0 0.0
          %2224 = vmatprep.subr.mxu0 0.0
          %2225 = vmatpush1.msra.mxu0 0.0
          %2226 = vmatprep.subr.mxu0 0.0
          %2227 = vmatpush1.msra.mxu0 0.0
          %2228 = vmatprep.subr.mxu0 0.0
          %2229 = vmatpush1.msra.mxu0 0.0
          %2230 = vmatprep.subr.mxu0 0.0
          %2231 = vmatpush1.msra.mxu0 0.0
          %2232 = vmatprep.subr.mxu0 0.0
          %2233 = vmatpush1.msra.mxu0 0.0
          %2234 = vmatprep.subr.mxu0 0.0
          %2235 = vmatpush1.msra.mxu0 0.0
          %2236 = vmatprep.subr.mxu0 0.0
          %2237 = vmatpush1.msra.mxu0 0.0
          %2238 = vmatprep.subr.mxu0 0.0
          %2239 = vmatpush1.msra.mxu0 0.0
          %2240 = vmatprep.subr.mxu0 0.0
          %2241 = vmatpush1.msra.mxu0 0.0
          %2242 = vmatprep.subr.mxu0 0.0
          %2243 = vmatpush1.msra.mxu0 %v2207
          %2244 = vmatprep.subr.mxu0 0.0
          %2245 = vmatpush1.msra.mxu0 %v2206
          %2246 = vmatprep.subr.mxu0 0.0
          %2247 = vmatpush1.msra.mxu0 %v2205
          %2248 = vmatprep.subr.mxu0 0.0
          %2249 = vmatpush1.msra.mxu0 %v2204
          %2250 = vmatprep.subr.mxu0 0.0
          %2251 = vmatpush2.msra.mxu0 0.0
          %2252 = vmatprep.subr.mxu0 0.0
          %2253 = vmatpush2.msra.mxu0 0.0
          %2254 = vmatprep.subr.mxu0 0.0
          %2255 = vmatpush2.msra.mxu0 0.0
          %2256 = vmatprep.subr.mxu0 0.0
          %2257 = vmatpush2.msra.mxu0 0.0
          %2258 = vmatprep.subr.mxu0 0.0
          %2259 = vmatpush2.msra.mxu0 0.0
          %2260 = vmatprep.subr.mxu0 0.0
          %2261 = vmatpush2.msra.mxu0 0.0
          %2262 = vmatprep.subr.mxu0 0.0
          %2263 = vmatpush2.msra.mxu0 0.0
          %2264 = vmatprep.subr.mxu0 0.0
          %2265 = vmatpush2.msra.mxu0 0.0
          %2266 = vmatprep.subr.mxu0 0.0
          %2267 = vmatpush2.msra.mxu0 0.0
          %2268 = vmatprep.subr.mxu0 0.0
          %2269 = vmatpush2.msra.mxu0 0.0
          %2270 = vmatprep.subr.mxu0 0.0
          %2271 = vmatpush2.msra.mxu0 0.0
          %2272 = vmatprep.subr.mxu0 0.0
          %2273 = vmatpush2.msra.mxu0 0.0
          %2274 = vmatprep.subr.mxu0 0.0
          %2275 = vmatpush2.msra.mxu0 0.0
          %2276 = vmatprep.subr.mxu0 0.0
          %2277 = vmatpush2.msra.mxu0 0.0
          %2278 = vmatprep.subr.mxu0 0.0
          %2279 = vmatpush2.msra.mxu0 0.0
          %2280 = vmatprep.subr.mxu0 0.0
          %2281 = vmatpush2.msra.mxu0 0.0
          %2282 = vmatprep.mubr.f32.mxu0 0.0
          %2283 = vmatmul.mubr.f32.gmra.mxu0 %v2216
          %v2284 = vpop.f32.mrf.mxu0
          %v2285 = vadd.f32 %v2213, %v2284
          %v2286 = vpop.f32.mrf.mxu0
          %2287 = vdwg.mxu0
          %2288 = vst.msk [vmem:[%s560] sm:$0xff] %vm828, %v2285
        $region100: #{tpu_custom_call.1} parent=63 // pred_fallthru
          _
        %s2289 = sand.u32 %s314, 1
        %s2290 = scalar_lea.sflag [#allocation8], %s2289
        %s2291 = sand.u32 %s314, 1
        %s2292 = smul.addr %s2291, 8
        %s2293 = scalar_lea.vmem [#allocation18], %s2292
        // Predicated region
        $region101: #{tpu_custom_call.1} parent=63 // pred_check
          %p2294 = pneg %p324
        $region102: #{tpu_custom_call.1} parent=63 // pred_check_branch
          %2296 = sbr.rel (%p2294) target = $region104
        $region103: #{tpu_custom_call.1} parent=63 // pred_region
          %s2298 = ssub.s32 128, 128
          %2299 = vsyncadd %s2290, %s2298
          %s2300 = sadd.s32 %s39, %s38
          %s2301 = smul.addr %s2300, 128
          %s2302 = scalar_lea.hbm %s11, %s2301
          %s2304 = sshll.u32 %s2293, 4
          %s2305 = int_to_ptr.vmem [resolvable:$true] %s2304
          %2307 = dma.vmem_to_hbm [thread:$0]  %s2305, 128, %s2302, %s2290
        $region104: #{tpu_custom_call.1} parent=63 // pred_fallthru
          _
      $region64: #{tpu_custom_call.1} parent=5 // pred_fallthru
        _
      %p2308 = scmp.le.s32.totalorder 2, %s28
      // Predicated region
      $region105: #{tpu_custom_call.1} parent=5 // pred_check
        %p2309 = pneg %p2308
      $region106: #{tpu_custom_call.1} parent=5 // pred_check_branch
        %2311 = sbr.rel (%p2309) target = $region108
      $region107: #{tpu_custom_call.1} parent=5 // pred_region
        %s2312 = ssub.s32 %s28, 2
        // Predicated region
        $region109: #{tpu_custom_call.1} parent=107 // pred_check
          %p2313 = pneg %p330
        $region110: #{tpu_custom_call.1} parent=107 // pred_check_branch
          %2315 = sbr.rel (%p2313) target = $region112
        $region111: #{tpu_custom_call.1} parent=107 // pred_region
          %s2316 = sand.u32 %s315, 1
          %s2317 = scalar_lea.sflag [#allocation8], %s2316
          %s2318 = sand.u32 %s315, 1
          %s2319 = smul.addr %s2318, 8
          %s2320 = scalar_lea.vmem [#allocation18], %s2319
          %2321 = dma.done %s2317, 128
        $region112: #{tpu_custom_call.1} parent=107 // pred_fallthru
          _
      $region108: #{tpu_custom_call.1} parent=5 // pred_fallthru
        _
    $region6: #{tpu_custom_call.1} parent=1 // loop_footer
      %s32 = sadd.s32 1, %s28
    $region7: #{tpu_custom_call.1} parent=1 // loop_footer_branch
      %27 = sbr.rel target = $region3
    $region8: #{tpu_custom_call.1} parent=1 // loop_exit
      _
    %2322 = vsyncpa [#allocation7], 1
    %s2323 = scalar_lea.sflag [#allocation7], 1
    %2324 = vsyncpa %s2323, 1
    %2325 = vsyncpa [#allocation10], 1
    %s2326 = scalar_lea.sflag [#allocation10], 1
    %2327 = vsyncpa %s2326, 1
    %2328 = vsyncpa [#allocation13], 1
    %2329 = vsyncpa [#allocation16], 1
    %2330 = vsyncpa [#allocation8], 1
    %s2331 = scalar_lea.sflag [#allocation8], 1
    %2332 = vsyncpa %s2331, 1

</llo_original>
